<compile_context>
chip_gen: v7x
topology: tpu7x:2x2x1
jax: 0.10.0
libtpu: 0.0.40
codegen_flags: <defaults>
</compile_context>

<pallas_src>
import jax
import jax.numpy as jnp
from jax.experimental import pallas as pl
from jax.experimental.pallas import tpu as pltpu

BN_EPS = 1e-5


def _bilinear_matrix(n_in: int, n_out: int) -> jnp.ndarray:
    """Interpolation matrix M (n_out, n_in): out = M @ in, align_corners=True."""
    if n_in == 1:
        return jnp.ones((n_out, 1), jnp.float32)
    src = jnp.arange(n_out, dtype=jnp.float32) * (n_in - 1) / (n_out - 1)
    lo = jnp.clip(jnp.floor(src).astype(jnp.int32), 0, n_in - 2)
    frac = src - lo.astype(jnp.float32)
    rows = jnp.arange(n_out)
    m = jnp.zeros((n_out, n_in), jnp.float32)
    m = m.at[rows, lo].add(1.0 - frac)
    m = m.at[rows, lo + 1].add(frac)
    return m


def _shift_rows(m: jnp.ndarray, d: int) -> jnp.ndarray:
    """S_d @ m : row y of the result is m[y + d - 1], zero when out of range.

    Encodes the conv's zero-padding + spatial tap shift as a linear map.
    """
    zero = jnp.zeros((1, m.shape[1]), m.dtype)
    if d == 0:
        return jnp.concatenate([zero, m[:-1]], axis=0)
    if d == 1:
        return m
    return jnp.concatenate([m[1:], zero], axis=0)


# --------------- Kernel A: fused upsample + pad + conv + BN-stats -----------
def _up_conv_stats_kernel(x_ref, q_ref, mhs_ref, conv_ref, stats_ref):
    # x_ref:     (1, h, Cin*w)      input with channels folded onto the lane axis
    # q_ref:     (Cin*w, 3*Cout*W)  column-upsample matrices with conv dx-taps
    #                               and channel mixing pre-folded into weights
    # mhs_ref:   (3, H, h)          row-upsample matrix per conv dy-tap
    # conv_ref:  (1, H, Cout*W)     conv output, channels interleaved on lanes
    # stats_ref: (1, 2, Cout*W)     per-batch [sum, sum-of-squares] over H
    H = mhs_ref.shape[1]
    cw = conv_ref.shape[2]                       # Cout * W

    # One big contraction: (h, Cin*w) @ (Cin*w, 3*Cout*W) -> (h, 3*Cout*W)
    g = jnp.dot(x_ref[0], q_ref[...], preferred_element_type=jnp.float32)

    # Three row-interp matmuls (one per dy tap), lane-aligned 256-wide slices.
    acc = jnp.zeros((H, cw), jnp.float32)
    for r in range(3):
        acc = acc + jnp.dot(mhs_ref[r], g[:, r * cw:(r + 1) * cw],
                            preferred_element_type=jnp.float32)

    conv_ref[0] = acc                            # lane-dense (256-lane) store

    # Per-batch BN partials (reduced to per-channel scalars in the wrapper).
    s = jnp.sum(acc, axis=0, keepdims=True)
    ss = jnp.sum(acc * acc, axis=0, keepdims=True)
    stats_ref[0] = jnp.concatenate([s, ss], axis=0)


# --------------------- Kernel B: BN affine + ReLU + NCHW --------------------
def _bn_relu_kernel(conv_ref, scale_ref, shift_ref, o_ref):
    # conv_ref: (1, H, Cout*W); scale/shift: (1, Cout*W); o_ref: (1, Cout, H, W)
    _, Cout, H, W = o_ref.shape
    z = jnp.maximum(conv_ref[0] * scale_ref[...] + shift_ref[...], 0.0)
    # De-interleave [co, x] lane groups into NCHW channel planes (final output
    # format forces W-wide stores here; everything upstream stays lane-dense).
    for co in range(Cout):
        o_ref[0, co] = z[:, co * W:(co + 1) * W]


# ------------------------------- wrapper ------------------------------------
def upsample_layer_forward(x_nchw, params):
    N, Cin, h, w = x_nchw.shape
    Cout = params["conv_w"].shape[0]
    H, W = 2 * h, 2 * w

    mh = _bilinear_matrix(h, H)                                       # (H, h)
    mw = _bilinear_matrix(w, W)                                       # (W, w)
    mhs = jnp.stack([_shift_rows(mh, d) for d in range(3)], axis=0)   # (3, H, h)
    mws = jnp.stack([_shift_rows(mw, d) for d in range(3)], axis=0)   # (3, W, w)

    # Weight-sized precompute: fold conv dx-taps + channel mix into the column
    # interpolation.  qbig[ci*w + j, (dy*Cout + co)*W + X]
    #   = sum_dx conv_w[co, ci, dy, dx] * mws[dx, X, j]
    # (conv bias intentionally dropped: cancels under training-mode BN)
    wgt = params["conv_w"].astype(jnp.float32)
    qbig = jnp.einsum('oirs,sXj->ijroX', wgt, mws).reshape(Cin * w, 3 * Cout * W)

    # Tiny, input-sized permutation so the channel contraction is one matmul.
    x_perm = jnp.transpose(x_nchw.astype(jnp.float32),
                           (0, 2, 1, 3)).reshape(N, h, Cin * w)

    conv, stats = pl.pallas_call(
        _up_conv_stats_kernel,
        out_shape=(jax.ShapeDtypeStruct((N, H, Cout * W), jnp.float32),
                   jax.ShapeDtypeStruct((N, 2, Cout * W), jnp.float32)),
        grid=(N,),
        in_specs=[
            pl.BlockSpec((1, h, Cin * w), lambda n: (n, 0, 0)),
            pl.BlockSpec((Cin * w, 3 * Cout * W), lambda n: (0, 0)),
            pl.BlockSpec((3, H, h), lambda n: (0, 0, 0)),
        ],
        out_specs=(
            pl.BlockSpec((1, H, Cout * W), lambda n: (n, 0, 0)),
            pl.BlockSpec((1, 2, Cout * W), lambda n: (n, 0, 0)),
        ),
        compiler_params=pltpu.CompilerParams(
            dimension_semantics=("parallel",),
            vmem_limit_bytes=32 * 1024 * 1024),
    )(x_perm, qbig, mhs)

    # Tiny stat combine (N*2*Cout*W values) -> fold BN into scale/shift.
    cnt = jnp.float32(N * H * W)
    st = stats.sum(axis=0).reshape(2, Cout, W).sum(axis=2)            # (2, Cout)
    mean = st[0] / cnt
    var = st[1] / cnt - mean * mean          # biased variance (BN training fwd)
    inv = jax.lax.rsqrt(var + BN_EPS)
    scale = params["bn_gamma"].astype(jnp.float32) * inv
    shift = params["bn_beta"].astype(jnp.float32) - mean * scale
    scale_l = jnp.repeat(scale, W).reshape(1, Cout * W)
    shift_l = jnp.repeat(shift, W).reshape(1, Cout * W)

    out = pl.pallas_call(
        _bn_relu_kernel,
        out_shape=jax.ShapeDtypeStruct((N, Cout, H, W), jnp.float32),
        grid=(N,),
        in_specs=[
            pl.BlockSpec((1, H, Cout * W), lambda n: (n, 0, 0)),
            pl.BlockSpec((1, Cout * W), lambda n: (0, 0)),
            pl.BlockSpec((1, Cout * W), lambda n: (0, 0)),
        ],
        out_specs=pl.BlockSpec((1, Cout, H, W), lambda n: (n, 0, 0, 0)),
        compiler_params=pltpu.CompilerParams(
            dimension_semantics=("parallel",)),
    )(conv, scale_l, shift_l)
    return out                                 # already NCHW


# ----------------------------- pure-JAX reference ---------------------------
def reference_forward(x_nchw, params):
    N, Cin, h, w = x_nchw.shape
    H, W = 2 * h, 2 * w
    mh = _bilinear_matrix(h, H)
    mw = _bilinear_matrix(w, W)
    up = jnp.einsum('Hh,nchw,Ww->ncHW', mh, x_nchw, mw,
                    precision=jax.lax.Precision.HIGHEST)
    y = jax.lax.conv_general_dilated(
        up, params["conv_w"], window_strides=(1, 1), padding=((1, 1), (1, 1)),
        dimension_numbers=('NCHW', 'OIHW', 'NCHW'),
        precision=jax.lax.Precision.HIGHEST)
    y = y + params["conv_b"][None, :, None, None]
    mean = jnp.mean(y, axis=(0, 2, 3), keepdims=True)
    var = jnp.mean((y - mean) ** 2, axis=(0, 2, 3), keepdims=True)
    yn = (y - mean) * jax.lax.rsqrt(var + BN_EPS)
    yn = yn * params["bn_gamma"][None, :, None, None] \
         + params["bn_beta"][None, :, None, None]
    return jnp.maximum(yn, 0.0)


if __name__ == "__main__":
    key = jax.random.PRNGKey(0)
    k1, k2, k3, k4, k5 = jax.random.split(key, 5)

    N, in_ch, out_ch, h, w = 2, 4, 8, 16, 16        # upsampled -> 32x32
    x = jax.random.normal(k1, (N, in_ch, h, w), jnp.float32)

    fan_in = in_ch * 3 * 3
    bound = 1.0 / (fan_in ** 0.5)
    params = {
        "conv_w": jax.random.uniform(k2, (out_ch, in_ch, 3, 3), jnp.float32,
                                     -bound, bound),
        "conv_b": jax.random.uniform(k3, (out_ch,), jnp.float32, -bound, bound),
        "bn_gamma": jax.random.uniform(k4, (out_ch,), jnp.float32, 0.5, 1.5),
        "bn_beta": jax.random.uniform(k5, (out_ch,), jnp.float32, -0.1, 0.1),
    }

    out = jax.jit(upsample_layer_forward)(x, params)
    out = jax.block_until_ready(out)
    assert out.shape == (N, out_ch, 2 * h, 2 * w)

    ref = reference_forward(x, params)
    err = float(jnp.max(jnp.abs(out - ref)))
    if err > 1e-2:
        raise AssertionError(f"mismatch vs reference, max abs err = {err}")
    print("KERNEL_OK")
</pallas_src>

<mosaic_0001>
module attributes {stable_mosaic.version = 11 : i64} {
  func.func private @main(%arg0: i32) attributes {dimension_semantics = [#tpu.dimension_semantics<core_parallel>], iteration_bounds = array<i64: 2>, tpu.core_type = #tpu.core_type<sc_scalar_subcore>, window_params = []} {
    return
  }
}

module attributes {stable_mosaic.version = 11 : i64} {
  func.func private @main(%arg0: i32) attributes {dimension_semantics = [#tpu.dimension_semantics<core_parallel>], iteration_bounds = array<i64: 2>, tpu.core_type = #tpu.core_type<sc_scalar_subcore>, window_params = []} {
    return
  }
}

module attributes {stable_mosaic.version = 11 : i64} {
  func.func @_up_conv_stats_kernel(%arg0: i32, %arg1: memref<1x16x64xf32, #tpu.memory_space<vmem>>, %arg2: memref<64x768xf32, #tpu.memory_space<vmem>>, %arg3: memref<3x32x16xf32, #tpu.memory_space<vmem>>, %arg4: memref<1x32x256xf32, #tpu.memory_space<vmem>>, %arg5: memref<1x2x256xf32, #tpu.memory_space<vmem>>) attributes {dimension_semantics = [#tpu.dimension_semantics<parallel>], iteration_bounds = array<i64: 2>, scalar_prefetch = 0 : i64, scratch_operands = 0 : i64, tpu.core_type = #tpu.core_type<tc>, window_params = [{transform_indices = @transform_0, window_bounds = array<i64: 1, 16, 64>}, {pipeline_mode = #tpu.pipeline_mode<synchronous>, transform_indices = @transform_1, window_bounds = array<i64: 64, 768>}, {pipeline_mode = #tpu.pipeline_mode<synchronous>, transform_indices = @transform_2, window_bounds = array<i64: 3, 32, 16>}, {transform_indices = @transform_3, window_bounds = array<i64: 1, 32, 256>}, {transform_indices = @transform_4, window_bounds = array<i64: 1, 2, 256>}]} {
    %c0 = arith.constant 0 : index
    %c0_0 = arith.constant 0 : index
    %c0_1 = arith.constant 0 : index
    %0 = vector.load %arg1[%c0, %c0_0, %c0_1] : memref<1x16x64xf32, #tpu.memory_space<vmem>>, vector<1x16x64xf32>
    %1 = vector.shape_cast %0 : vector<1x16x64xf32> to vector<16x64xf32>
    %c0_2 = arith.constant 0 : index
    %c0_3 = arith.constant 0 : index
    %2 = vector.load %arg2[%c0_2, %c0_3] : memref<64x768xf32, #tpu.memory_space<vmem>>, vector<64x768xf32>
    %cst = arith.constant dense<0.000000e+00> : vector<16x768xf32>
    %3 = tpu.matmul %1, %2, %cst {dimension_numbers = #tpu.dot_dimension_numbers<[1], [0], [0], [1], [0, 0, 1, 1], [], []>} : vector<16x64xf32>, vector<64x768xf32>, vector<16x768xf32> -> vector<16x768xf32>
    %cst_4 = arith.constant 0.000000e+00 : f32
    %4 = vector.broadcast %cst_4 : f32 to vector<32x256xf32>
    %c0_5 = arith.constant 0 : index
    %c0_6 = arith.constant 0 : index
    %c0_7 = arith.constant 0 : index
    %5 = vector.load %arg3[%c0_5, %c0_6, %c0_7] : memref<3x32x16xf32, #tpu.memory_space<vmem>>, vector<1x32x16xf32>
    %6 = vector.shape_cast %5 : vector<1x32x16xf32> to vector<32x16xf32>
    %7 = vector.extract_strided_slice %3 {offsets = [0, 0], sizes = [16, 256], strides = [1, 1]} : vector<16x768xf32> to vector<16x256xf32>
    %cst_8 = arith.constant dense<0.000000e+00> : vector<32x256xf32>
    %8 = tpu.matmul %6, %7, %cst_8 {dimension_numbers = #tpu.dot_dimension_numbers<[1], [0], [0], [1], [0, 0, 1, 1], [], []>} : vector<32x16xf32>, vector<16x256xf32>, vector<32x256xf32> -> vector<32x256xf32>
    %9 = arith.addf %4, %8 : vector<32x256xf32>
    %c1 = arith.constant 1 : index
    %c0_9 = arith.constant 0 : index
    %c0_10 = arith.constant 0 : index
    %10 = vector.load %arg3[%c1, %c0_9, %c0_10] : memref<3x32x16xf32, #tpu.memory_space<vmem>>, vector<1x32x16xf32>
    %11 = vector.shape_cast %10 : vector<1x32x16xf32> to vector<32x16xf32>
    %12 = vector.extract_strided_slice %3 {offsets = [0, 256], sizes = [16, 256], strides = [1, 1]} : vector<16x768xf32> to vector<16x256xf32>
    %cst_11 = arith.constant dense<0.000000e+00> : vector<32x256xf32>
    %13 = tpu.matmul %11, %12, %cst_11 {dimension_numbers = #tpu.dot_dimension_numbers<[1], [0], [0], [1], [0, 0, 1, 1], [], []>} : vector<32x16xf32>, vector<16x256xf32>, vector<32x256xf32> -> vector<32x256xf32>
    %14 = arith.addf %9, %13 : vector<32x256xf32>
    %c2 = arith.constant 2 : index
    %c0_12 = arith.constant 0 : index
    %c0_13 = arith.constant 0 : index
    %15 = vector.load %arg3[%c2, %c0_12, %c0_13] : memref<3x32x16xf32, #tpu.memory_space<vmem>>, vector<1x32x16xf32>
    %16 = vector.shape_cast %15 : vector<1x32x16xf32> to vector<32x16xf32>
    %17 = vector.extract_strided_slice %3 {offsets = [0, 512], sizes = [16, 256], strides = [1, 1]} : vector<16x768xf32> to vector<16x256xf32>
    %cst_14 = arith.constant dense<0.000000e+00> : vector<32x256xf32>
    %18 = tpu.matmul %16, %17, %cst_14 {dimension_numbers = #tpu.dot_dimension_numbers<[1], [0], [0], [1], [0, 0, 1, 1], [], []>} : vector<32x16xf32>, vector<16x256xf32>, vector<32x256xf32> -> vector<32x256xf32>
    %19 = arith.addf %14, %18 : vector<32x256xf32>
    %c0_15 = arith.constant 0 : index
    %c0_16 = arith.constant 0 : index
    %c0_17 = arith.constant 0 : index
    %20 = vector.load %arg4[%c0_15, %c0_16, %c0_17] : memref<1x32x256xf32, #tpu.memory_space<vmem>>, vector<1x32x256xf32>
    %21 = vector.shape_cast %20 : vector<1x32x256xf32> to vector<32x256xf32>
    %22 = vector.shape_cast %19 : vector<32x256xf32> to vector<1x32x256xf32>
    tpu.vector_store %arg4[%c0_15, %c0_16, %c0_17], %22 {strides = array<i32>} : memref<1x32x256xf32, #tpu.memory_space<vmem>>, vector<1x32x256xf32>,
    %cst_18 = arith.constant dense<0.000000e+00> : vector<256xf32>
    %23 = vector.multi_reduction <add>, %19, %cst_18 [0] : vector<32x256xf32> to vector<256xf32>
    %24 = vector.shape_cast %23 : vector<256xf32> to vector<1x256xf32>
    %25 = arith.mulf %19, %19 : vector<32x256xf32>
    %cst_19 = arith.constant dense<0.000000e+00> : vector<256xf32>
    %26 = vector.multi_reduction <add>, %25, %cst_19 [0] : vector<32x256xf32> to vector<256xf32>
    %27 = vector.shape_cast %26 : vector<256xf32> to vector<1x256xf32>
    %28 = tpu.concatenate %24, %27 in 0 : vector<1x256xf32>, vector<1x256xf32> -> vector<2x256xf32>
    %c0_20 = arith.constant 0 : index
    %c0_21 = arith.constant 0 : index
    %c0_22 = arith.constant 0 : index
    %29 = vector.load %arg5[%c0_20, %c0_21, %c0_22] : memref<1x2x256xf32, #tpu.memory_space<vmem>>, vector<1x2x256xf32>
    %30 = vector.shape_cast %29 : vector<1x2x256xf32> to vector<2x256xf32>
    %31 = vector.shape_cast %28 : vector<2x256xf32> to vector<1x2x256xf32>
    tpu.vector_store %arg5[%c0_20, %c0_21, %c0_22], %31 {strides = array<i32>} : memref<1x2x256xf32, #tpu.memory_space<vmem>>, vector<1x2x256xf32>,
    return
  }
  func.func @transform_0(%arg0: i32) -> (i32, i32, i32) {
    %c0_i32 = arith.constant 0 : i32
    %c0_i32_0 = arith.constant 0 : i32
    %c0_i32_1 = arith.constant 0 : i32
    return %arg0, %c0_i32, %c0_i32_0 : i32, i32, i32
  }
  func.func @transform_1(%arg0: i32) -> (i32, i32) {
    %c0_i32 = arith.constant 0 : i32
    %c0_i32_0 = arith.constant 0 : i32
    %c0_i32_1 = arith.constant 0 : i32
    return %c0_i32, %c0_i32_0 : i32, i32
  }
  func.func @transform_2(%arg0: i32) -> (i32, i32, i32) {
    %c0_i32 = arith.constant 0 : i32
    %c0_i32_0 = arith.constant 0 : i32
    %c0_i32_1 = arith.constant 0 : i32
    %c0_i32_2 = arith.constant 0 : i32
    return %c0_i32, %c0_i32_0, %c0_i32_1 : i32, i32, i32
  }
  func.func @transform_3(%arg0: i32) -> (i32, i32, i32) {
    %c0_i32 = arith.constant 0 : i32
    %c0_i32_0 = arith.constant 0 : i32
    %c0_i32_1 = arith.constant 0 : i32
    return %arg0, %c0_i32, %c0_i32_0 : i32, i32, i32
  }
  func.func @transform_4(%arg0: i32) -> (i32, i32, i32) {
    %c0_i32 = arith.constant 0 : i32
    %c0_i32_0 = arith.constant 0 : i32
    %c0_i32_1 = arith.constant 0 : i32
    return %arg0, %c0_i32, %c0_i32_0 : i32, i32, i32
  }
}

module attributes {stable_mosaic.version = 11 : i64} {
  func.func @_bn_relu_kernel(%arg0: i32, %arg1: memref<1x32x256xf32, #tpu.memory_space<vmem>>, %arg2: memref<1x256xf32, #tpu.memory_space<vmem>>, %arg3: memref<1x256xf32, #tpu.memory_space<vmem>>, %arg4: memref<1x8x32x32xf32, #tpu.memory_space<vmem>>) attributes {dimension_semantics = [#tpu.dimension_semantics<parallel>], iteration_bounds = array<i64: 2>, scalar_prefetch = 0 : i64, scratch_operands = 0 : i64, tpu.core_type = #tpu.core_type<tc>, window_params = [{transform_indices = @transform_0, window_bounds = array<i64: 1, 32, 256>}, {pipeline_mode = #tpu.pipeline_mode<synchronous>, transform_indices = @transform_1, window_bounds = array<i64: 1, 256>}, {pipeline_mode = #tpu.pipeline_mode<synchronous>, transform_indices = @transform_2, window_bounds = array<i64: 1, 256>}, {transform_indices = @transform_3, window_bounds = array<i64: 1, 8, 32, 32>}]} {
    %c0 = arith.constant 0 : index
    %c0_0 = arith.constant 0 : index
    %c0_1 = arith.constant 0 : index
    %0 = vector.load %arg1[%c0, %c0_0, %c0_1] : memref<1x32x256xf32, #tpu.memory_space<vmem>>, vector<1x32x256xf32>
    %1 = vector.shape_cast %0 : vector<1x32x256xf32> to vector<32x256xf32>
    %c0_2 = arith.constant 0 : index
    %c0_3 = arith.constant 0 : index
    %2 = vector.load %arg2[%c0_2, %c0_3] : memref<1x256xf32, #tpu.memory_space<vmem>>, vector<1x256xf32>
    %3 = vector.broadcast %2 : vector<1x256xf32> to vector<32x256xf32>
    %4 = arith.mulf %1, %3 : vector<32x256xf32>
    %c0_4 = arith.constant 0 : index
    %c0_5 = arith.constant 0 : index
    %5 = vector.load %arg3[%c0_4, %c0_5] : memref<1x256xf32, #tpu.memory_space<vmem>>, vector<1x256xf32>
    %6 = vector.broadcast %5 : vector<1x256xf32> to vector<32x256xf32>
    %7 = arith.addf %4, %6 : vector<32x256xf32>
    %cst = arith.constant 0.000000e+00 : f32
    %8 = vector.broadcast %cst : f32 to vector<32x256xf32>
    %9 = arith.maximumf %7, %8 : vector<32x256xf32>
    %10 = vector.extract_strided_slice %9 {offsets = [0, 0], sizes = [32, 32], strides = [1, 1]} : vector<32x256xf32> to vector<32x32xf32>
    %c0_6 = arith.constant 0 : index
    %c0_7 = arith.constant 0 : index
    %c0_8 = arith.constant 0 : index
    %c0_9 = arith.constant 0 : index
    %11 = vector.load %arg4[%c0_6, %c0_7, %c0_8, %c0_9] : memref<1x8x32x32xf32, #tpu.memory_space<vmem>>, vector<1x1x32x32xf32>
    %12 = vector.shape_cast %11 : vector<1x1x32x32xf32> to vector<32x32xf32>
    %13 = vector.shape_cast %10 : vector<32x32xf32> to vector<1x1x32x32xf32>
    tpu.vector_store %arg4[%c0_6, %c0_7, %c0_8, %c0_9], %13 {strides = array<i32>} : memref<1x8x32x32xf32, #tpu.memory_space<vmem>>, vector<1x1x32x32xf32>,
    %14 = vector.extract_strided_slice %9 {offsets = [0, 32], sizes = [32, 32], strides = [1, 1]} : vector<32x256xf32> to vector<32x32xf32>
    %c0_10 = arith.constant 0 : index
    %c1 = arith.constant 1 : index
    %c0_11 = arith.constant 0 : index
    %c0_12 = arith.constant 0 : index
    %15 = vector.load %arg4[%c0_10, %c1, %c0_11, %c0_12] : memref<1x8x32x32xf32, #tpu.memory_space<vmem>>, vector<1x1x32x32xf32>
    %16 = vector.shape_cast %15 : vector<1x1x32x32xf32> to vector<32x32xf32>
    %17 = vector.shape_cast %14 : vector<32x32xf32> to vector<1x1x32x32xf32>
    tpu.vector_store %arg4[%c0_10, %c1, %c0_11, %c0_12], %17 {strides = array<i32>} : memref<1x8x32x32xf32, #tpu.memory_space<vmem>>, vector<1x1x32x32xf32>,
    %18 = vector.extract_strided_slice %9 {offsets = [0, 64], sizes = [32, 32], strides = [1, 1]} : vector<32x256xf32> to vector<32x32xf32>
    %c0_13 = arith.constant 0 : index
    %c2 = arith.constant 2 : index
    %c0_14 = arith.constant 0 : index
    %c0_15 = arith.constant 0 : index
    %19 = vector.load %arg4[%c0_13, %c2, %c0_14, %c0_15] : memref<1x8x32x32xf32, #tpu.memory_space<vmem>>, vector<1x1x32x32xf32>
    %20 = vector.shape_cast %19 : vector<1x1x32x32xf32> to vector<32x32xf32>
    %21 = vector.shape_cast %18 : vector<32x32xf32> to vector<1x1x32x32xf32>
    tpu.vector_store %arg4[%c0_13, %c2, %c0_14, %c0_15], %21 {strides = array<i32>} : memref<1x8x32x32xf32, #tpu.memory_space<vmem>>, vector<1x1x32x32xf32>,
    %22 = vector.extract_strided_slice %9 {offsets = [0, 96], sizes = [32, 32], strides = [1, 1]} : vector<32x256xf32> to vector<32x32xf32>
    %c0_16 = arith.constant 0 : index
    %c3 = arith.constant 3 : index
    %c0_17 = arith.constant 0 : index
    %c0_18 = arith.constant 0 : index
    %23 = vector.load %arg4[%c0_16, %c3, %c0_17, %c0_18] : memref<1x8x32x32xf32, #tpu.memory_space<vmem>>, vector<1x1x32x32xf32>
    %24 = vector.shape_cast %23 : vector<1x1x32x32xf32> to vector<32x32xf32>
    %25 = vector.shape_cast %22 : vector<32x32xf32> to vector<1x1x32x32xf32>
    tpu.vector_store %arg4[%c0_16, %c3, %c0_17, %c0_18], %25 {strides = array<i32>} : memref<1x8x32x32xf32, #tpu.memory_space<vmem>>, vector<1x1x32x32xf32>,
    %26 = vector.extract_strided_slice %9 {offsets = [0, 128], sizes = [32, 32], strides = [1, 1]} : vector<32x256xf32> to vector<32x32xf32>
    %c0_19 = arith.constant 0 : index
    %c4 = arith.constant 4 : index
    %c0_20 = arith.constant 0 : index
    %c0_21 = arith.constant 0 : index
    %27 = vector.load %arg4[%c0_19, %c4, %c0_20, %c0_21] : memref<1x8x32x32xf32, #tpu.memory_space<vmem>>, vector<1x1x32x32xf32>
    %28 = vector.shape_cast %27 : vector<1x1x32x32xf32> to vector<32x32xf32>
    %29 = vector.shape_cast %26 : vector<32x32xf32> to vector<1x1x32x32xf32>
    tpu.vector_store %arg4[%c0_19, %c4, %c0_20, %c0_21], %29 {strides = array<i32>} : memref<1x8x32x32xf32, #tpu.memory_space<vmem>>, vector<1x1x32x32xf32>,
    %30 = vector.extract_strided_slice %9 {offsets = [0, 160], sizes = [32, 32], strides = [1, 1]} : vector<32x256xf32> to vector<32x32xf32>
    %c0_22 = arith.constant 0 : index
    %c5 = arith.constant 5 : index
    %c0_23 = arith.constant 0 : index
    %c0_24 = arith.constant 0 : index
    %31 = vector.load %arg4[%c0_22, %c5, %c0_23, %c0_24] : memref<1x8x32x32xf32, #tpu.memory_space<vmem>>, vector<1x1x32x32xf32>
    %32 = vector.shape_cast %31 : vector<1x1x32x32xf32> to vector<32x32xf32>
    %33 = vector.shape_cast %30 : vector<32x32xf32> to vector<1x1x32x32xf32>
    tpu.vector_store %arg4[%c0_22, %c5, %c0_23, %c0_24], %33 {strides = array<i32>} : memref<1x8x32x32xf32, #tpu.memory_space<vmem>>, vector<1x1x32x32xf32>,
    %34 = vector.extract_strided_slice %9 {offsets = [0, 192], sizes = [32, 32], strides = [1, 1]} : vector<32x256xf32> to vector<32x32xf32>
    %c0_25 = arith.constant 0 : index
    %c6 = arith.constant 6 : index
    %c0_26 = arith.constant 0 : index
    %c0_27 = arith.constant 0 : index
    %35 = vector.load %arg4[%c0_25, %c6, %c0_26, %c0_27] : memref<1x8x32x32xf32, #tpu.memory_space<vmem>>, vector<1x1x32x32xf32>
    %36 = vector.shape_cast %35 : vector<1x1x32x32xf32> to vector<32x32xf32>
    %37 = vector.shape_cast %34 : vector<32x32xf32> to vector<1x1x32x32xf32>
    tpu.vector_store %arg4[%c0_25, %c6, %c0_26, %c0_27], %37 {strides = array<i32>} : memref<1x8x32x32xf32, #tpu.memory_space<vmem>>, vector<1x1x32x32xf32>,
    %38 = vector.extract_strided_slice %9 {offsets = [0, 224], sizes = [32, 32], strides = [1, 1]} : vector<32x256xf32> to vector<32x32xf32>
    %c0_28 = arith.constant 0 : index
    %c7 = arith.constant 7 : index
    %c0_29 = arith.constant 0 : index
    %c0_30 = arith.constant 0 : index
    %39 = vector.load %arg4[%c0_28, %c7, %c0_29, %c0_30] : memref<1x8x32x32xf32, #tpu.memory_space<vmem>>, vector<1x1x32x32xf32>
    %40 = vector.shape_cast %39 : vector<1x1x32x32xf32> to vector<32x32xf32>
    %41 = vector.shape_cast %38 : vector<32x32xf32> to vector<1x1x32x32xf32>
    tpu.vector_store %arg4[%c0_28, %c7, %c0_29, %c0_30], %41 {strides = array<i32>} : memref<1x8x32x32xf32, #tpu.memory_space<vmem>>, vector<1x1x32x32xf32>,
    return
  }
  func.func @transform_0(%arg0: i32) -> (i32, i32, i32) {
    %c0_i32 = arith.constant 0 : i32
    %c0_i32_0 = arith.constant 0 : i32
    %c0_i32_1 = arith.constant 0 : i32
    return %arg0, %c0_i32, %c0_i32_0 : i32, i32, i32
  }
  func.func @transform_1(%arg0: i32) -> (i32, i32) {
    %c0_i32 = arith.constant 0 : i32
    %c0_i32_0 = arith.constant 0 : i32
    %c0_i32_1 = arith.constant 0 : i32
    return %c0_i32, %c0_i32_0 : i32, i32
  }
  func.func @transform_2(%arg0: i32) -> (i32, i32) {
    %c0_i32 = arith.constant 0 : i32
    %c0_i32_0 = arith.constant 0 : i32
    %c0_i32_1 = arith.constant 0 : i32
    return %c0_i32, %c0_i32_0 : i32, i32
  }
  func.func @transform_3(%arg0: i32) -> (i32, i32, i32, i32) {
    %c0_i32 = arith.constant 0 : i32
    %c0_i32_0 = arith.constant 0 : i32
    %c0_i32_1 = arith.constant 0 : i32
    %c0_i32_2 = arith.constant 0 : i32
    return %arg0, %c0_i32, %c0_i32_0, %c0_i32_1 : i32, i32, i32, i32
  }
}

</mosaic_0001>

<llo_original>
// kernel: upsample_layer_forward.2
$region0: #{upsample_layer_forward.2}
  #allocation0 [shape = 'u32[]', space=smem, size = 0x4, offset = 0x4, fixed_abs, tag = 'smem constant byte address 0x4 - core index']
  #allocation1 [shape = 'u32[144,128]{1,0:T(1,128)}', space=vmem, size = 0x12000, scoped, tag = 'internal scratch']
  %s0 = inlined_call_operand.vmem [shape: f32[2,16,64], index: 0, kind: input, shape index: {}]
  %s1 = inlined_call_operand.vmem [shape: f32[64,768], index: 1, kind: input, shape index: {}]
  %s2 = inlined_call_operand.vmem [shape: f32[3,32,16], index: 2, kind: input, shape index: {}]
  %s3 = inlined_call_operand.vmem [shape: f32[2,32,256], index: 3, kind: output, shape index: {0}]
  %s4 = inlined_call_operand.vmem [shape: f32[2,2,256], index: 4, kind: output, shape index: {1}]
  %5 = xla_tuple %s3, %s4
  %s6 = sld [smem:[#allocation0]]
  $region53: #{upsample_layer_forward.2} parent=0
    _
  %s8 = ssub.s32 1, %s6
  %s9 = scalar_select 0, %s8, %s6
  loop: start=0, step=1, limit=4
  $region2: #{upsample_layer_forward.2} parent=0 // loop_pre_header
    _
  $region3: #{upsample_layer_forward.2} parent=0 // loop_header
    %s11 = sphi 0, %s15
    %p12 = scmp.ge.s32.totalorder %s11, 4
    %s21 = sphi 0, %s23
    %s24 = sphi 0, %s21
    %s25 = sphi 0, %s24
    %s41 = sphi 0, %s25
    %s45 = sphi 0, %s45
    %s47 = sphi 0, %s45
    %s48 = sphi 0, %s47
    %s62 = sphi 0, %s48
    %s66 = sphi 0, %s66
    %s68 = sphi 0, %s66
    %s69 = sphi 0, %s68
    %s83 = sphi 0, %s69
    %s89 = sphi 0, %s91
    %s92 = sphi 0, %s89
    %s93 = sphi 0, %s92
    %s109 = sphi 0, %s93
    %s115 = sphi 0, %s117
    %s118 = sphi 0, %s115
    %s119 = sphi 0, %s118
    %s135 = sphi 0, %s119
  $region4: #{upsample_layer_forward.2} parent=0 // loop_header_branch
    %14 = sbr.rel (%p12) target = $region8
  $region5: #{upsample_layer_forward.2} parent=0 // loop_body
    %s16 = ssub.s32 %s11, 1
    %s17 = ssub.s32 %s11, 2
    %s18 = sadd.s32 %s11, 1
    %s19 = ssub.s32 %s11, %s18
    %p20 = scmp.eq.s32.totalorder %s19, 0
    %s22 = sadd.s32 %s21, 1
    %s23 = scalar_select %p20, %s21, %s22
    %p26 = pneg %p20
    %p27 = scmp.eq.s32.totalorder %s11, 1
    %p28 = por %p26, %p27
    %p29 = scmp.ne.s32.totalorder %s21, %s24
    %p30 = scmp.eq.s32.totalorder %s11, 0
    %p31 = por %p29, %p30
    %p32 = scmp.ne.s32.totalorder %s21, %s24
    %p33 = scmp.eq.s32.totalorder %s16, 1
    %p34 = por %p32, %p33
    %p35 = scmp.ne.s32.totalorder %s24, %s25
    %p36 = scmp.eq.s32.totalorder %s16, 0
    %p37 = por %p35, %p36
    %p38 = scmp.ne.s32.totalorder %s24, %s25
    %p39 = scmp.eq.s32.totalorder %s17, 1
    %p40 = por %p38, %p39
    %p42 = scmp.ne.s32.totalorder %s25, %s41
    %p43 = scmp.eq.s32.totalorder %s17, 0
    %p44 = por %p42, %p43
    %s46 = sadd.s32 %s45, 1
    %p49 = scmp.eq.s32.totalorder %s11, 1
    %p50 = scmp.ne.s32.totalorder %s45, %s47
    %p51 = scmp.eq.s32.totalorder %s11, 0
    %p52 = por %p50, %p51
    %p53 = scmp.ne.s32.totalorder %s45, %s47
    %p54 = scmp.eq.s32.totalorder %s16, 1
    %p55 = por %p53, %p54
    %p56 = scmp.ne.s32.totalorder %s47, %s48
    %p57 = scmp.eq.s32.totalorder %s16, 0
    %p58 = por %p56, %p57
    %p59 = scmp.ne.s32.totalorder %s47, %s48
    %p60 = scmp.eq.s32.totalorder %s17, 1
    %p61 = por %p59, %p60
    %p63 = scmp.ne.s32.totalorder %s48, %s62
    %p64 = scmp.eq.s32.totalorder %s17, 0
    %p65 = por %p63, %p64
    %s67 = sadd.s32 %s66, 1
    %p70 = scmp.eq.s32.totalorder %s11, 1
    %p71 = scmp.ne.s32.totalorder %s66, %s68
    %p72 = scmp.eq.s32.totalorder %s11, 0
    %p73 = por %p71, %p72
    %p74 = scmp.ne.s32.totalorder %s66, %s68
    %p75 = scmp.eq.s32.totalorder %s16, 1
    %p76 = por %p74, %p75
    %p77 = scmp.ne.s32.totalorder %s68, %s69
    %p78 = scmp.eq.s32.totalorder %s16, 0
    %p79 = por %p77, %p78
    %p80 = scmp.ne.s32.totalorder %s68, %s69
    %p81 = scmp.eq.s32.totalorder %s17, 1
    %p82 = por %p80, %p81
    %p84 = scmp.ne.s32.totalorder %s69, %s83
    %p85 = scmp.eq.s32.totalorder %s17, 0
    %p86 = por %p84, %p85
    %s87 = ssub.s32 %s11, %s18
    %p88 = scmp.eq.s32.totalorder %s87, 0
    %s90 = sadd.s32 %s89, 1
    %s91 = scalar_select %p88, %s89, %s90
    %p94 = pneg %p88
    %p95 = scmp.eq.s32.totalorder %s11, 1
    %p96 = por %p94, %p95
    %p97 = scmp.ne.s32.totalorder %s89, %s92
    %p98 = scmp.eq.s32.totalorder %s11, 0
    %p99 = por %p97, %p98
    %p100 = scmp.ne.s32.totalorder %s89, %s92
    %p101 = scmp.eq.s32.totalorder %s16, 1
    %p102 = por %p100, %p101
    %p103 = scmp.ne.s32.totalorder %s92, %s93
    %p104 = scmp.eq.s32.totalorder %s16, 0
    %p105 = por %p103, %p104
    %p106 = scmp.ne.s32.totalorder %s92, %s93
    %p107 = scmp.eq.s32.totalorder %s17, 1
    %p108 = por %p106, %p107
    %p110 = scmp.ne.s32.totalorder %s93, %s109
    %p111 = scmp.eq.s32.totalorder %s17, 0
    %p112 = por %p110, %p111
    %s113 = ssub.s32 %s11, %s18
    %p114 = scmp.eq.s32.totalorder %s113, 0
    %s116 = sadd.s32 %s115, 1
    %s117 = scalar_select %p114, %s115, %s116
    %p120 = pneg %p114
    %p121 = scmp.eq.s32.totalorder %s11, 1
    %p122 = por %p120, %p121
    %p123 = scmp.ne.s32.totalorder %s115, %s118
    %p124 = scmp.eq.s32.totalorder %s11, 0
    %p125 = por %p123, %p124
    %p126 = scmp.ne.s32.totalorder %s115, %s118
    %p127 = scmp.eq.s32.totalorder %s16, 1
    %p128 = por %p126, %p127
    %p129 = scmp.ne.s32.totalorder %s118, %s119
    %p130 = scmp.eq.s32.totalorder %s16, 0
    %p131 = por %p129, %p130
    %p132 = scmp.ne.s32.totalorder %s118, %s119
    %p133 = scmp.eq.s32.totalorder %s17, 1
    %p134 = por %p132, %p133
    %p136 = scmp.ne.s32.totalorder %s119, %s135
    %p137 = scmp.eq.s32.totalorder %s17, 0
    %p138 = por %p136, %p137
    %p139 = scmp.le.s32.totalorder 1, %s11
    %p140 = scmp.lt.s32.totalorder %s11, 3
    %p141 = pnand %p139, %p140
    %p142 = pneg %p141
    // Predicated region
    $region9: #{upsample_layer_forward.2} parent=5 // pred_check
      _
    $region10: #{upsample_layer_forward.2} parent=5 // pred_check_branch
      %144 = sbr.rel (%p141) target = $region12
    $region11: #{upsample_layer_forward.2} parent=5 // pred_region
      %s145 = ssub.s32 %s11, 1
      // Predicated region
      $region13: #{upsample_layer_forward.2} parent=11 // pred_check
        %p146 = pneg %p58
      $region14: #{upsample_layer_forward.2} parent=11 // pred_check_branch
        %148 = sbr.rel (%p146) target = $region16
      $region15: #{upsample_layer_forward.2} parent=11 // pred_region
        _
      $region16: #{upsample_layer_forward.2} parent=11 // pred_fallthru
        _
      // Predicated region
      $region17: #{upsample_layer_forward.2} parent=11 // pred_check
        %p149 = pneg %p79
      $region18: #{upsample_layer_forward.2} parent=11 // pred_check_branch
        %151 = sbr.rel (%p149) target = $region20
      $region19: #{upsample_layer_forward.2} parent=11 // pred_region
        _
      $region20: #{upsample_layer_forward.2} parent=11 // pred_fallthru
        _
    $region12: #{upsample_layer_forward.2} parent=5 // pred_fallthru
      _
    %p152 = scmp.lt.s32.totalorder %s11, 2
    // Predicated region
    $region21: #{upsample_layer_forward.2} parent=5 // pred_check
      %p153 = pneg %p152
    $region22: #{upsample_layer_forward.2} parent=5 // pred_check_branch
      %155 = sbr.rel (%p153) target = $region24
    $region23: #{upsample_layer_forward.2} parent=5 // pred_region
      // Predicated region
      $region25: #{upsample_layer_forward.2} parent=23 // pred_check
        %p156 = pneg %p31
      $region26: #{upsample_layer_forward.2} parent=23 // pred_check_branch
        %158 = sbr.rel (%p156) target = $region28
      $region27: #{upsample_layer_forward.2} parent=23 // pred_region
        %p159 = scmp.lt.s32.totalorder %s11, 1
        %s160 = scalar_select %p159, %s11, 1
        %s161 = smul.addr %s160, 2
        %s162 = smul.addr %s161, 8
        %s163 = scalar_lea.vmem %s0, %s162
      $region28: #{upsample_layer_forward.2} parent=23 // pred_fallthru
        _
    $region24: #{upsample_layer_forward.2} parent=5 // pred_fallthru
      _
    %p164 = scmp.le.s32.totalorder 1, %s11
    %p165 = scmp.lt.s32.totalorder %s11, 3
    %p166 = pnand %p164, %p165
    %p167 = pneg %p166
    // Predicated region
    $region29: #{upsample_layer_forward.2} parent=5 // pred_check
      _
    $region30: #{upsample_layer_forward.2} parent=5 // pred_check_branch
      %169 = sbr.rel (%p166) target = $region32
    $region31: #{upsample_layer_forward.2} parent=5 // pred_region
      %s170 = ssub.s32 %s11, 1
      %p171 = scmp.lt.s32.totalorder %s16, 1
      %s172 = scalar_select %p171, %s16, 1
      %s173 = smul.addr %s172, 2
      %s174 = smul.addr %s173, 8
      %s175 = scalar_lea.vmem %s0, %s174
      %p176 = pneg %p37
      %p177 = pneg %p34
      %p178 = pneg %p58
      %p179 = pneg %p55
      %p180 = pneg %p79
      %p181 = pneg %p76
      %p182 = pneg %p105
      %p183 = pneg %p102
      %p184 = scmp.lt.s32.totalorder %s16, 1
      %s185 = scalar_select %p184, %s16, 1
      %s186 = smul.addr %s185, 8
      %s187 = smul.addr %s186, 8
      %s188 = scalar_lea.vmem %s3, %s187
      %p189 = pneg %p131
      %p190 = pneg %p128
      %p191 = scmp.lt.s32.totalorder %s16, 1
      %s192 = scalar_select %p191, %s16, 1
      %s193 = smul.addr %s192, 2
      %s194 = smul.addr %s193, 2
      %s195 = scalar_lea.vmem %s4, %s194
      %p196 = scmp.lt.s32.totalorder %s16, 1
      %s197 = scalar_select %p196, %s16, 1
      %s198 = smul.addr %s197, 2
      %s199 = smul.addr %s198, 8
      %s200 = scalar_lea.vmem %s0, %s199
      %p201 = scmp.lt.s32.totalorder %s16, 1
      %s202 = scalar_select %p201, %s16, 1
      %s203 = smul.addr %s202, 8
      %s204 = smul.addr %s203, 8
      %s205 = scalar_lea.vmem %s3, %s204
      %p206 = scmp.lt.s32.totalorder %s16, 1
      %s207 = scalar_select %p206, %s16, 1
      %s208 = smul.addr %s207, 2
      %s209 = smul.addr %s208, 2
      %s210 = scalar_lea.vmem %s4, %s209
      %v211 = vld [vmem:[%s200] sm:$0xff]
      %v212 = vld [vmem:[%s200 + $0x8] sm:$0xff]
      %v213 = vld [vmem:[%s1] sm:$0xff]
      %v214 = vld [vmem:[%s1 + $0x8] sm:$0xff]
      %v215 = vld [vmem:[%s1 + $0x10] sm:$0xff]
      %v216 = vld [vmem:[%s1 + $0x18] sm:$0xff]
      %v217 = vld [vmem:[%s1 + $0x20] sm:$0xff]
      %v218 = vld [vmem:[%s1 + $0x28] sm:$0xff]
      %v219 = vld [vmem:[%s1 + $0x30] sm:$0xff]
      %v220 = vld [vmem:[%s1 + $0x38] sm:$0xff]
      %v221 = vld [vmem:[%s1 + $0x40] sm:$0xff]
      %v222 = vld [vmem:[%s1 + $0x48] sm:$0xff]
      %v223 = vld [vmem:[%s1 + $0x50] sm:$0xff]
      %v224 = vld [vmem:[%s1 + $0x58] sm:$0xff]
      %v225 = vld [vmem:[%s1 + $0x60] sm:$0xff]
      %v226 = vld [vmem:[%s1 + $0x68] sm:$0xff]
      %v227 = vld [vmem:[%s1 + $0x70] sm:$0xff]
      %v228 = vld [vmem:[%s1 + $0x78] sm:$0xff]
      %v229 = vld [vmem:[%s1 + $0x80] sm:$0xff]
      %v230 = vld [vmem:[%s1 + $0x88] sm:$0xff]
      %v231 = vld [vmem:[%s1 + $0x90] sm:$0xff]
      %v232 = vld [vmem:[%s1 + $0x98] sm:$0xff]
      %v233 = vld [vmem:[%s1 + $0xa0] sm:$0xff]
      %v234 = vld [vmem:[%s1 + $0xa8] sm:$0xff]
      %v235 = vld [vmem:[%s1 + $0xb0] sm:$0xff]
      %v236 = vld [vmem:[%s1 + $0xb8] sm:$0xff]
      %v237 = vld [vmem:[%s1 + $0xc0] sm:$0xff]
      %v238 = vld [vmem:[%s1 + $0xc8] sm:$0xff]
      %v239 = vld [vmem:[%s1 + $0xd0] sm:$0xff]
      %v240 = vld [vmem:[%s1 + $0xd8] sm:$0xff]
      %v241 = vld [vmem:[%s1 + $0xe0] sm:$0xff]
      %v242 = vld [vmem:[%s1 + $0xe8] sm:$0xff]
      %v243 = vld [vmem:[%s1 + $0xf0] sm:$0xff]
      %v244 = vld [vmem:[%s1 + $0xf8] sm:$0xff]
      %v245 = vld [vmem:[%s1 + $0x100] sm:$0xff]
      %v246 = vld [vmem:[%s1 + $0x108] sm:$0xff]
      %v247 = vld [vmem:[%s1 + $0x110] sm:$0xff]
      %v248 = vld [vmem:[%s1 + $0x118] sm:$0xff]
      %v249 = vld [vmem:[%s1 + $0x120] sm:$0xff]
      %v250 = vld [vmem:[%s1 + $0x128] sm:$0xff]
      %v251 = vld [vmem:[%s1 + $0x130] sm:$0xff]
      %v252 = vld [vmem:[%s1 + $0x138] sm:$0xff]
      %v253 = vld [vmem:[%s1 + $0x140] sm:$0xff]
      %v254 = vld [vmem:[%s1 + $0x148] sm:$0xff]
      %v255 = vld [vmem:[%s1 + $0x150] sm:$0xff]
      %v256 = vld [vmem:[%s1 + $0x158] sm:$0xff]
      %v257 = vld [vmem:[%s1 + $0x160] sm:$0xff]
      %v258 = vld [vmem:[%s1 + $0x168] sm:$0xff]
      %v259 = vld [vmem:[%s1 + $0x170] sm:$0xff]
      %v260 = vld [vmem:[%s1 + $0x178] sm:$0xff]
      %vm261 = vcmask 523264
      %v263 = vsel %vm261, %v211, 0
      %v266 = vsel %vm261, %v212, 0
      %268 = vmatprep.subr.mxu0 %v214
      %269 = vmatpush1.msra.mxu0 %v213
      %270 = vmatprep.subr.mxu0 %v220
      %271 = vmatpush1.msra.mxu0 %v219
      %272 = vmatprep.subr.mxu0 %v226
      %273 = vmatpush1.msra.mxu0 %v225
      %274 = vmatprep.subr.mxu0 %v232
      %275 = vmatpush1.msra.mxu0 %v231
      %276 = vmatprep.subr.mxu0 %v238
      %277 = vmatpush1.msra.mxu0 %v237
      %278 = vmatprep.subr.mxu0 %v244
      %279 = vmatpush1.msra.mxu0 %v243
      %280 = vmatprep.subr.mxu0 %v250
      %281 = vmatpush1.msra.mxu0 %v249
      %282 = vmatprep.subr.mxu0 %v256
      %283 = vmatpush1.msra.mxu0 %v255
      %284 = vmatprep.subr.mxu0 0.0
      %285 = vmatpush1.msra.mxu0 0.0
      %286 = vmatprep.subr.mxu0 0.0
      %287 = vmatpush1.msra.mxu0 0.0
      %288 = vmatprep.subr.mxu0 0.0
      %289 = vmatpush1.msra.mxu0 0.0
      %290 = vmatprep.subr.mxu0 0.0
      %291 = vmatpush1.msra.mxu0 0.0
      %292 = vmatprep.subr.mxu0 0.0
      %293 = vmatpush1.msra.mxu0 0.0
      %294 = vmatprep.subr.mxu0 0.0
      %295 = vmatpush1.msra.mxu0 0.0
      %296 = vmatprep.subr.mxu0 0.0
      %297 = vmatpush1.msra.mxu0 0.0
      %298 = vmatprep.subr.mxu0 0.0
      %299 = vmatpush1.msra.mxu0 0.0
      %300 = vmatprep.subr.mxu0 0.0
      %301 = vmatpush1.msra.mxu0 0.0
      %302 = vmatprep.subr.mxu0 0.0
      %303 = vmatpush1.msra.mxu0 0.0
      %304 = vmatprep.subr.mxu0 0.0
      %305 = vmatpush1.msra.mxu0 0.0
      %306 = vmatprep.subr.mxu0 0.0
      %307 = vmatpush1.msra.mxu0 0.0
      %308 = vmatprep.subr.mxu0 0.0
      %309 = vmatpush1.msra.mxu0 0.0
      %310 = vmatprep.subr.mxu0 0.0
      %311 = vmatpush1.msra.mxu0 0.0
      %312 = vmatprep.subr.mxu0 0.0
      %313 = vmatpush1.msra.mxu0 0.0
      %314 = vmatprep.subr.mxu0 0.0
      %315 = vmatpush1.msra.mxu0 0.0
      %316 = vmatprep.subr.mxu0 0.0
      %317 = vmatpush1.msra.mxu0 0.0
      %318 = vmatprep.subr.mxu0 0.0
      %319 = vmatpush1.msra.mxu0 0.0
      %320 = vmatprep.subr.mxu0 0.0
      %321 = vmatpush1.msra.mxu0 0.0
      %322 = vmatprep.subr.mxu0 0.0
      %323 = vmatpush1.msra.mxu0 0.0
      %324 = vmatprep.subr.mxu0 0.0
      %325 = vmatpush1.msra.mxu0 0.0
      %326 = vmatprep.subr.mxu0 0.0
      %327 = vmatpush1.msra.mxu0 0.0
      %328 = vmatprep.subr.mxu0 0.0
      %329 = vmatpush1.msra.mxu0 0.0
      %330 = vmatprep.subr.mxu0 0.0
      %331 = vmatpush1.msra.mxu0 0.0
      %332 = vmatprep.mubr.f32.mxu0 0.0
      %333 = vmatmul.mubr.f32.gmra.mrb[0].mxu0 %v263
      %v334 = vpop.f32.mrb[0].mxu0
      %v335 = vadd.f32 0.0, %v334
      %v336 = vpop.f32.mrb[0].mxu0
      %v337 = vadd.f32 0.0, %v336
      %338 = vmatprep.mubr.f32.mxu0 0.0
      %339 = vmatmul.mubr.f32.gmra.mrb[0].mxu0 %v266
      %v340 = vpop.f32.mrb[0].mxu0
      %v341 = vadd.f32 0.0, %v340
      %v342 = vpop.f32.mrb[0].mxu0
      %v343 = vadd.f32 0.0, %v342
      %344 = vdwg.mxu0
      %345 = vmatprep.subr.mxu0 %v216
      %346 = vmatpush1.msra.mxu0 %v215
      %347 = vmatprep.subr.mxu0 %v222
      %348 = vmatpush1.msra.mxu0 %v221
      %349 = vmatprep.subr.mxu0 %v228
      %350 = vmatpush1.msra.mxu0 %v227
      %351 = vmatprep.subr.mxu0 %v234
      %352 = vmatpush1.msra.mxu0 %v233
      %353 = vmatprep.subr.mxu0 %v240
      %354 = vmatpush1.msra.mxu0 %v239
      %355 = vmatprep.subr.mxu0 %v246
      %356 = vmatpush1.msra.mxu0 %v245
      %357 = vmatprep.subr.mxu0 %v252
      %358 = vmatpush1.msra.mxu0 %v251
      %359 = vmatprep.subr.mxu0 %v258
      %360 = vmatpush1.msra.mxu0 %v257
      %361 = vmatprep.subr.mxu0 0.0
      %362 = vmatpush1.msra.mxu0 0.0
      %363 = vmatprep.subr.mxu0 0.0
      %364 = vmatpush1.msra.mxu0 0.0
      %365 = vmatprep.subr.mxu0 0.0
      %366 = vmatpush1.msra.mxu0 0.0
      %367 = vmatprep.subr.mxu0 0.0
      %368 = vmatpush1.msra.mxu0 0.0
      %369 = vmatprep.subr.mxu0 0.0
      %370 = vmatpush1.msra.mxu0 0.0
      %371 = vmatprep.subr.mxu0 0.0
      %372 = vmatpush1.msra.mxu0 0.0
      %373 = vmatprep.subr.mxu0 0.0
      %374 = vmatpush1.msra.mxu0 0.0
      %375 = vmatprep.subr.mxu0 0.0
      %376 = vmatpush1.msra.mxu0 0.0
      %377 = vmatprep.subr.mxu0 0.0
      %378 = vmatpush1.msra.mxu0 0.0
      %379 = vmatprep.subr.mxu0 0.0
      %380 = vmatpush1.msra.mxu0 0.0
      %381 = vmatprep.subr.mxu0 0.0
      %382 = vmatpush1.msra.mxu0 0.0
      %383 = vmatprep.subr.mxu0 0.0
      %384 = vmatpush1.msra.mxu0 0.0
      %385 = vmatprep.subr.mxu0 0.0
      %386 = vmatpush1.msra.mxu0 0.0
      %387 = vmatprep.subr.mxu0 0.0
      %388 = vmatpush1.msra.mxu0 0.0
      %389 = vmatprep.subr.mxu0 0.0
      %390 = vmatpush1.msra.mxu0 0.0
      %391 = vmatprep.subr.mxu0 0.0
      %392 = vmatpush1.msra.mxu0 0.0
      %393 = vmatprep.subr.mxu0 0.0
      %394 = vmatpush1.msra.mxu0 0.0
      %395 = vmatprep.subr.mxu0 0.0
      %396 = vmatpush1.msra.mxu0 0.0
      %397 = vmatprep.subr.mxu0 0.0
      %398 = vmatpush1.msra.mxu0 0.0
      %399 = vmatprep.subr.mxu0 0.0
      %400 = vmatpush1.msra.mxu0 0.0
      %401 = vmatprep.subr.mxu0 0.0
      %402 = vmatpush1.msra.mxu0 0.0
      %403 = vmatprep.subr.mxu0 0.0
      %404 = vmatpush1.msra.mxu0 0.0
      %405 = vmatprep.subr.mxu0 0.0
      %406 = vmatpush1.msra.mxu0 0.0
      %407 = vmatprep.subr.mxu0 0.0
      %408 = vmatpush1.msra.mxu0 0.0
      %409 = vmatprep.mubr.f32.mxu0 0.0
      %410 = vmatmul.mubr.f32.gmra.mrb[0].mxu0 %v263
      %v411 = vpop.f32.mrb[0].mxu0
      %v412 = vadd.f32 0.0, %v411
      %v413 = vpop.f32.mrb[0].mxu0
      %v414 = vadd.f32 0.0, %v413
      %415 = vmatprep.mubr.f32.mxu0 0.0
      %416 = vmatmul.mubr.f32.gmra.mrb[0].mxu0 %v266
      %v417 = vpop.f32.mrb[0].mxu0
      %v418 = vadd.f32 0.0, %v417
      %v419 = vpop.f32.mrb[0].mxu0
      %v420 = vadd.f32 0.0, %v419
      %421 = vdwg.mxu0
      %422 = vmatprep.subr.mxu0 %v218
      %423 = vmatpush1.msra.mxu0 %v217
      %424 = vmatprep.subr.mxu0 %v224
      %425 = vmatpush1.msra.mxu0 %v223
      %426 = vmatprep.subr.mxu0 %v230
      %427 = vmatpush1.msra.mxu0 %v229
      %428 = vmatprep.subr.mxu0 %v236
      %429 = vmatpush1.msra.mxu0 %v235
      %430 = vmatprep.subr.mxu0 %v242
      %431 = vmatpush1.msra.mxu0 %v241
      %432 = vmatprep.subr.mxu0 %v248
      %433 = vmatpush1.msra.mxu0 %v247
      %434 = vmatprep.subr.mxu0 %v254
      %435 = vmatpush1.msra.mxu0 %v253
      %436 = vmatprep.subr.mxu0 %v260
      %437 = vmatpush1.msra.mxu0 %v259
      %438 = vmatprep.subr.mxu0 0.0
      %439 = vmatpush1.msra.mxu0 0.0
      %440 = vmatprep.subr.mxu0 0.0
      %441 = vmatpush1.msra.mxu0 0.0
      %442 = vmatprep.subr.mxu0 0.0
      %443 = vmatpush1.msra.mxu0 0.0
      %444 = vmatprep.subr.mxu0 0.0
      %445 = vmatpush1.msra.mxu0 0.0
      %446 = vmatprep.subr.mxu0 0.0
      %447 = vmatpush1.msra.mxu0 0.0
      %448 = vmatprep.subr.mxu0 0.0
      %449 = vmatpush1.msra.mxu0 0.0
      %450 = vmatprep.subr.mxu0 0.0
      %451 = vmatpush1.msra.mxu0 0.0
      %452 = vmatprep.subr.mxu0 0.0
      %453 = vmatpush1.msra.mxu0 0.0
      %454 = vmatprep.subr.mxu0 0.0
      %455 = vmatpush1.msra.mxu0 0.0
      %456 = vmatprep.subr.mxu0 0.0
      %457 = vmatpush1.msra.mxu0 0.0
      %458 = vmatprep.subr.mxu0 0.0
      %459 = vmatpush1.msra.mxu0 0.0
      %460 = vmatprep.subr.mxu0 0.0
      %461 = vmatpush1.msra.mxu0 0.0
      %462 = vmatprep.subr.mxu0 0.0
      %463 = vmatpush1.msra.mxu0 0.0
      %464 = vmatprep.subr.mxu0 0.0
      %465 = vmatpush1.msra.mxu0 0.0
      %466 = vmatprep.subr.mxu0 0.0
      %467 = vmatpush1.msra.mxu0 0.0
      %468 = vmatprep.subr.mxu0 0.0
      %469 = vmatpush1.msra.mxu0 0.0
      %470 = vmatprep.subr.mxu0 0.0
      %471 = vmatpush1.msra.mxu0 0.0
      %472 = vmatprep.subr.mxu0 0.0
      %473 = vmatpush1.msra.mxu0 0.0
      %474 = vmatprep.subr.mxu0 0.0
      %475 = vmatpush1.msra.mxu0 0.0
      %476 = vmatprep.subr.mxu0 0.0
      %477 = vmatpush1.msra.mxu0 0.0
      %478 = vmatprep.subr.mxu0 0.0
      %479 = vmatpush1.msra.mxu0 0.0
      %480 = vmatprep.subr.mxu0 0.0
      %481 = vmatpush1.msra.mxu0 0.0
      %482 = vmatprep.subr.mxu0 0.0
      %483 = vmatpush1.msra.mxu0 0.0
      %484 = vmatprep.subr.mxu0 0.0
      %485 = vmatpush1.msra.mxu0 0.0
      %486 = vmatprep.mubr.f32.mxu0 0.0
      %487 = vmatmul.mubr.f32.gmra.mrb[0].mxu0 %v263
      %v488 = vpop.f32.mrb[0].mxu0
      %v489 = vadd.f32 0.0, %v488
      %v490 = vpop.f32.mrb[0].mxu0
      %v491 = vadd.f32 0.0, %v490
      %492 = vmatprep.mubr.f32.mxu0 0.0
      %493 = vmatmul.mubr.f32.gmra.mrb[0].mxu0 %v266
      %v494 = vpop.f32.mrb[0].mxu0
      %v495 = vadd.f32 0.0, %v494
      %v496 = vpop.f32.mrb[0].mxu0
      %v497 = vadd.f32 0.0, %v496
      %498 = vdwg.mxu0
      %v499 = vld [vmem:[%s2] sm:$0xff]
      %v500 = vld [vmem:[%s2 + $0x8] sm:$0xff]
      %v501 = vld [vmem:[%s2 + $0x10] sm:$0xff]
      %v502 = vld [vmem:[%s2 + $0x18] sm:$0xff]
      %s503 = scalar_lea.vmem %s2, 32
      %v504 = vld [vmem:[%s503] sm:$0xff]
      %v505 = vld [vmem:[%s503 + $0x8] sm:$0xff]
      %v506 = vld [vmem:[%s503 + $0x10] sm:$0xff]
      %v507 = vld [vmem:[%s503 + $0x18] sm:$0xff]
      %vm508 = vcmask 130048
      %v510 = vsel %vm508, %v504, 0
      %v513 = vsel %vm508, %v505, 0
      %v516 = vsel %vm508, %v506, 0
      %v519 = vsel %vm508, %v507, 0
      %521 = vmatprep.subr.mxu0 %v414
      %522 = vmatpush1.msra.mxu0 %v412
      %523 = vmatprep.subr.mxu0 %v420
      %524 = vmatpush1.msra.mxu0 %v418
      %525 = vmatprep.subr.mxu0 0.0
      %526 = vmatpush1.msra.mxu0 0.0
      %527 = vmatprep.subr.mxu0 0.0
      %528 = vmatpush1.msra.mxu0 0.0
      %529 = vmatprep.subr.mxu0 0.0
      %530 = vmatpush1.msra.mxu0 0.0
      %531 = vmatprep.subr.mxu0 0.0
      %532 = vmatpush1.msra.mxu0 0.0
      %533 = vmatprep.subr.mxu0 0.0
      %534 = vmatpush1.msra.mxu0 0.0
      %535 = vmatprep.subr.mxu0 0.0
      %536 = vmatpush1.msra.mxu0 0.0
      %537 = vmatprep.subr.mxu0 0.0
      %538 = vmatpush1.msra.mxu0 0.0
      %539 = vmatprep.subr.mxu0 0.0
      %540 = vmatpush1.msra.mxu0 0.0
      %541 = vmatprep.subr.mxu0 0.0
      %542 = vmatpush1.msra.mxu0 0.0
      %543 = vmatprep.subr.mxu0 0.0
      %544 = vmatpush1.msra.mxu0 0.0
      %545 = vmatprep.subr.mxu0 0.0
      %546 = vmatpush1.msra.mxu0 0.0
      %547 = vmatprep.subr.mxu0 0.0
      %548 = vmatpush1.msra.mxu0 0.0
      %549 = vmatprep.subr.mxu0 0.0
      %550 = vmatpush1.msra.mxu0 0.0
      %551 = vmatprep.subr.mxu0 0.0
      %552 = vmatpush1.msra.mxu0 0.0
      %553 = vmatprep.subr.mxu0 0.0
      %554 = vmatpush1.msra.mxu0 0.0
      %555 = vmatprep.subr.mxu0 0.0
      %556 = vmatpush1.msra.mxu0 0.0
      %557 = vmatprep.subr.mxu0 0.0
      %558 = vmatpush1.msra.mxu0 0.0
      %559 = vmatprep.subr.mxu0 0.0
      %560 = vmatpush1.msra.mxu0 0.0
      %561 = vmatprep.subr.mxu0 0.0
      %562 = vmatpush1.msra.mxu0 0.0
      %563 = vmatprep.subr.mxu0 0.0
      %564 = vmatpush1.msra.mxu0 0.0
      %565 = vmatprep.subr.mxu0 0.0
      %566 = vmatpush1.msra.mxu0 0.0
      %567 = vmatprep.subr.mxu0 0.0
      %568 = vmatpush1.msra.mxu0 0.0
      %569 = vmatprep.subr.mxu0 0.0
      %570 = vmatpush1.msra.mxu0 0.0
      %571 = vmatprep.subr.mxu0 0.0
      %572 = vmatpush1.msra.mxu0 0.0
      %573 = vmatprep.subr.mxu0 0.0
      %574 = vmatpush1.msra.mxu0 0.0
      %575 = vmatprep.subr.mxu0 0.0
      %576 = vmatpush1.msra.mxu0 0.0
      %577 = vmatprep.subr.mxu0 0.0
      %578 = vmatpush1.msra.mxu0 0.0
      %579 = vmatprep.subr.mxu0 0.0
      %580 = vmatpush1.msra.mxu0 0.0
      %581 = vmatprep.subr.mxu0 0.0
      %582 = vmatpush1.msra.mxu0 0.0
      %583 = vmatprep.subr.mxu0 0.0
      %584 = vmatpush1.msra.mxu0 0.0
      %585 = vmatprep.mubr.f32.mxu0 0.0
      %586 = vmatmul.mubr.f32.gmra.mrb[0].mxu0 %v510
      %v587 = vpop.f32.mrb[0].mxu0
      %v588 = vadd.f32 0.0, %v587
      %v589 = vpop.f32.mrb[0].mxu0
      %v590 = vadd.f32 0.0, %v589
      %591 = vmatprep.mubr.f32.mxu0 0.0
      %592 = vmatmul.mubr.f32.gmra.mrb[0].mxu0 %v513
      %v593 = vpop.f32.mrb[0].mxu0
      %v594 = vadd.f32 0.0, %v593
      %v595 = vpop.f32.mrb[0].mxu0
      %v596 = vadd.f32 0.0, %v595
      %597 = vmatprep.mubr.f32.mxu0 0.0
      %598 = vmatmul.mubr.f32.gmra.mrb[0].mxu0 %v516
      %v599 = vpop.f32.mrb[0].mxu0
      %v600 = vadd.f32 0.0, %v599
      %v601 = vpop.f32.mrb[0].mxu0
      %v602 = vadd.f32 0.0, %v601
      %603 = vmatprep.mubr.f32.mxu0 0.0
      %604 = vmatmul.mubr.f32.gmra.mrb[0].mxu0 %v519
      %v605 = vpop.f32.mrb[0].mxu0
      %v606 = vadd.f32 0.0, %v605
      %v607 = vpop.f32.mrb[0].mxu0
      %v608 = vadd.f32 0.0, %v607
      %609 = vdwg.mxu0
      %v611 = vsel %vm508, %v499, 0
      %v614 = vsel %vm508, %v500, 0
      %v617 = vsel %vm508, %v501, 0
      %v620 = vsel %vm508, %v502, 0
      %622 = vmatprep.subr.mxu0 %v337
      %623 = vmatpush1.msra.mxu0 %v335
      %624 = vmatprep.subr.mxu0 %v343
      %625 = vmatpush1.msra.mxu0 %v341
      %626 = vmatprep.subr.mxu0 0.0
      %627 = vmatpush1.msra.mxu0 0.0
      %628 = vmatprep.subr.mxu0 0.0
      %629 = vmatpush1.msra.mxu0 0.0
      %630 = vmatprep.subr.mxu0 0.0
      %631 = vmatpush1.msra.mxu0 0.0
      %632 = vmatprep.subr.mxu0 0.0
      %633 = vmatpush1.msra.mxu0 0.0
      %634 = vmatprep.subr.mxu0 0.0
      %635 = vmatpush1.msra.mxu0 0.0
      %636 = vmatprep.subr.mxu0 0.0
      %637 = vmatpush1.msra.mxu0 0.0
      %638 = vmatprep.subr.mxu0 0.0
      %639 = vmatpush1.msra.mxu0 0.0
      %640 = vmatprep.subr.mxu0 0.0
      %641 = vmatpush1.msra.mxu0 0.0
      %642 = vmatprep.subr.mxu0 0.0
      %643 = vmatpush1.msra.mxu0 0.0
      %644 = vmatprep.subr.mxu0 0.0
      %645 = vmatpush1.msra.mxu0 0.0
      %646 = vmatprep.subr.mxu0 0.0
      %647 = vmatpush1.msra.mxu0 0.0
      %648 = vmatprep.subr.mxu0 0.0
      %649 = vmatpush1.msra.mxu0 0.0
      %650 = vmatprep.subr.mxu0 0.0
      %651 = vmatpush1.msra.mxu0 0.0
      %652 = vmatprep.subr.mxu0 0.0
      %653 = vmatpush1.msra.mxu0 0.0
      %654 = vmatprep.subr.mxu0 0.0
      %655 = vmatpush1.msra.mxu0 0.0
      %656 = vmatprep.subr.mxu0 0.0
      %657 = vmatpush1.msra.mxu0 0.0
      %658 = vmatprep.subr.mxu0 0.0
      %659 = vmatpush1.msra.mxu0 0.0
      %660 = vmatprep.subr.mxu0 0.0
      %661 = vmatpush1.msra.mxu0 0.0
      %662 = vmatprep.subr.mxu0 0.0
      %663 = vmatpush1.msra.mxu0 0.0
      %664 = vmatprep.subr.mxu0 0.0
      %665 = vmatpush1.msra.mxu0 0.0
      %666 = vmatprep.subr.mxu0 0.0
      %667 = vmatpush1.msra.mxu0 0.0
      %668 = vmatprep.subr.mxu0 0.0
      %669 = vmatpush1.msra.mxu0 0.0
      %670 = vmatprep.subr.mxu0 0.0
      %671 = vmatpush1.msra.mxu0 0.0
      %672 = vmatprep.subr.mxu0 0.0
      %673 = vmatpush1.msra.mxu0 0.0
      %674 = vmatprep.subr.mxu0 0.0
      %675 = vmatpush1.msra.mxu0 0.0
      %676 = vmatprep.subr.mxu0 0.0
      %677 = vmatpush1.msra.mxu0 0.0
      %678 = vmatprep.subr.mxu0 0.0
      %679 = vmatpush1.msra.mxu0 0.0
      %680 = vmatprep.subr.mxu0 0.0
      %681 = vmatpush1.msra.mxu0 0.0
      %682 = vmatprep.subr.mxu0 0.0
      %683 = vmatpush1.msra.mxu0 0.0
      %684 = vmatprep.subr.mxu0 0.0
      %685 = vmatpush1.msra.mxu0 0.0
      %686 = vmatprep.mubr.f32.mxu0 0.0
      %687 = vmatmul.mubr.f32.gmra.mrb[0].mxu0 %v611
      %v688 = vpop.f32.mrb[0].mxu0
      %v689 = vadd.f32 %v588, %v688
      %v690 = vpop.f32.mrb[0].mxu0
      %v691 = vadd.f32 %v590, %v690
      %692 = vmatprep.mubr.f32.mxu0 0.0
      %693 = vmatmul.mubr.f32.gmra.mrb[0].mxu0 %v614
      %v694 = vpop.f32.mrb[0].mxu0
      %v695 = vadd.f32 %v594, %v694
      %v696 = vpop.f32.mrb[0].mxu0
      %v697 = vadd.f32 %v596, %v696
      %698 = vmatprep.mubr.f32.mxu0 0.0
      %699 = vmatmul.mubr.f32.gmra.mrb[0].mxu0 %v617
      %v700 = vpop.f32.mrb[0].mxu0
      %v701 = vadd.f32 %v600, %v700
      %v702 = vpop.f32.mrb[0].mxu0
      %v703 = vadd.f32 %v602, %v702
      %704 = vmatprep.mubr.f32.mxu0 0.0
      %705 = vmatmul.mubr.f32.gmra.mrb[0].mxu0 %v620
      %v706 = vpop.f32.mrb[0].mxu0
      %v707 = vadd.f32 %v606, %v706
      %v708 = vpop.f32.mrb[0].mxu0
      %v709 = vadd.f32 %v608, %v708
      %710 = vdwg.mxu0
      %s711 = scalar_lea.vmem %s2, 64
      %v712 = vld [vmem:[%s711] sm:$0xff]
      %v713 = vld [vmem:[%s711 + $0x8] sm:$0xff]
      %v714 = vld [vmem:[%s711 + $0x10] sm:$0xff]
      %v715 = vld [vmem:[%s711 + $0x18] sm:$0xff]
      %v717 = vsel %vm508, %v712, 0
      %v720 = vsel %vm508, %v713, 0
      %v723 = vsel %vm508, %v714, 0
      %v726 = vsel %vm508, %v715, 0
      %728 = vmatprep.subr.mxu0 %v491
      %729 = vmatpush1.msra.mxu0 %v489
      %730 = vmatprep.subr.mxu0 %v497
      %731 = vmatpush1.msra.mxu0 %v495
      %732 = vmatprep.subr.mxu0 0.0
      %733 = vmatpush1.msra.mxu0 0.0
      %734 = vmatprep.subr.mxu0 0.0
      %735 = vmatpush1.msra.mxu0 0.0
      %736 = vmatprep.subr.mxu0 0.0
      %737 = vmatpush1.msra.mxu0 0.0
      %738 = vmatprep.subr.mxu0 0.0
      %739 = vmatpush1.msra.mxu0 0.0
      %740 = vmatprep.subr.mxu0 0.0
      %741 = vmatpush1.msra.mxu0 0.0
      %742 = vmatprep.subr.mxu0 0.0
      %743 = vmatpush1.msra.mxu0 0.0
      %744 = vmatprep.subr.mxu0 0.0
      %745 = vmatpush1.msra.mxu0 0.0
      %746 = vmatprep.subr.mxu0 0.0
      %747 = vmatpush1.msra.mxu0 0.0
      %748 = vmatprep.subr.mxu0 0.0
      %749 = vmatpush1.msra.mxu0 0.0
      %750 = vmatprep.subr.mxu0 0.0
      %751 = vmatpush1.msra.mxu0 0.0
      %752 = vmatprep.subr.mxu0 0.0
      %753 = vmatpush1.msra.mxu0 0.0
      %754 = vmatprep.subr.mxu0 0.0
      %755 = vmatpush1.msra.mxu0 0.0
      %756 = vmatprep.subr.mxu0 0.0
      %757 = vmatpush1.msra.mxu0 0.0
      %758 = vmatprep.subr.mxu0 0.0
      %759 = vmatpush1.msra.mxu0 0.0
      %760 = vmatprep.subr.mxu0 0.0
      %761 = vmatpush1.msra.mxu0 0.0
      %762 = vmatprep.subr.mxu0 0.0
      %763 = vmatpush1.msra.mxu0 0.0
      %764 = vmatprep.subr.mxu0 0.0
      %765 = vmatpush1.msra.mxu0 0.0
      %766 = vmatprep.subr.mxu0 0.0
      %767 = vmatpush1.msra.mxu0 0.0
      %768 = vmatprep.subr.mxu0 0.0
      %769 = vmatpush1.msra.mxu0 0.0
      %770 = vmatprep.subr.mxu0 0.0
      %771 = vmatpush1.msra.mxu0 0.0
      %772 = vmatprep.subr.mxu0 0.0
      %773 = vmatpush1.msra.mxu0 0.0
      %774 = vmatprep.subr.mxu0 0.0
      %775 = vmatpush1.msra.mxu0 0.0
      %776 = vmatprep.subr.mxu0 0.0
      %777 = vmatpush1.msra.mxu0 0.0
      %778 = vmatprep.subr.mxu0 0.0
      %779 = vmatpush1.msra.mxu0 0.0
      %780 = vmatprep.subr.mxu0 0.0
      %781 = vmatpush1.msra.mxu0 0.0
      %782 = vmatprep.subr.mxu0 0.0
      %783 = vmatpush1.msra.mxu0 0.0
      %784 = vmatprep.subr.mxu0 0.0
      %785 = vmatpush1.msra.mxu0 0.0
      %786 = vmatprep.subr.mxu0 0.0
      %787 = vmatpush1.msra.mxu0 0.0
      %788 = vmatprep.subr.mxu0 0.0
      %789 = vmatpush1.msra.mxu0 0.0
      %790 = vmatprep.subr.mxu0 0.0
      %791 = vmatpush1.msra.mxu0 0.0
      %792 = vmatprep.mubr.f32.mxu0 0.0
      %793 = vmatmul.mubr.f32.gmra.mrb[0].mxu0 %v717
      %v794 = vpop.f32.mrb[0].mxu0
      %v795 = vadd.f32 0.0, %v794
      %v796 = vpop.f32.mrb[0].mxu0
      %v797 = vadd.f32 0.0, %v796
      %798 = vmatprep.mubr.f32.mxu0 0.0
      %799 = vmatmul.mubr.f32.gmra.mrb[0].mxu0 %v720
      %v800 = vpop.f32.mrb[0].mxu0
      %v801 = vadd.f32 0.0, %v800
      %v802 = vpop.f32.mrb[0].mxu0
      %v803 = vadd.f32 0.0, %v802
      %804 = vmatprep.mubr.f32.mxu0 0.0
      %805 = vmatmul.mubr.f32.gmra.mrb[0].mxu0 %v723
      %v806 = vpop.f32.mrb[0].mxu0
      %v807 = vadd.f32 0.0, %v806
      %v808 = vpop.f32.mrb[0].mxu0
      %v809 = vadd.f32 0.0, %v808
      %810 = vmatprep.mubr.f32.mxu0 0.0
      %811 = vmatmul.mubr.f32.gmra.mrb[0].mxu0 %v726
      %v812 = vpop.f32.mrb[0].mxu0
      %v813 = vadd.f32 0.0, %v812
      %v814 = vpop.f32.mrb[0].mxu0
      %v815 = vadd.f32 0.0, %v814
      %816 = vdwg.mxu0
      %v817 = vadd.f32 %v689, %v795
      %v818 = vadd.f32 %v691, %v797
      %v819 = vadd.f32 %v695, %v801
      %v820 = vadd.f32 %v697, %v803
      %v821 = vadd.f32 %v701, %v807
      %v822 = vadd.f32 %v703, %v809
      %v823 = vadd.f32 %v707, %v813
      %v824 = vadd.f32 %v709, %v815
      %825 = vst [vmem:[%s205] sm:$0xff] %v817
      %826 = vst [vmem:[%s205 + $0x8] sm:$0xff] %v818
      %827 = vst [vmem:[%s205 + $0x10] sm:$0xff] %v819
      %828 = vst [vmem:[%s205 + $0x18] sm:$0xff] %v820
      %829 = vst [vmem:[%s205 + $0x20] sm:$0xff] %v821
      %830 = vst [vmem:[%s205 + $0x28] sm:$0xff] %v822
      %831 = vst [vmem:[%s205 + $0x30] sm:$0xff] %v823
      %832 = vst [vmem:[%s205 + $0x38] sm:$0xff] %v824
      %v833 = vadd.f32 %v817, %v819
      %v834 = vadd.f32 %v833, %v821
      %v835 = vadd.f32 %v834, %v823
      %v836 = vrot.slane %v835, 4
      %v837 = vadd.f32 %v835, %v836
      %v838 = vrot.slane %v837, 2
      %v839 = vadd.f32 %v837, %v838
      %v840 = vrot.slane %v839, 1
      %v841 = vadd.f32 %v839, %v840
      %v842 = vadd.f32 %v818, %v820
      %v843 = vadd.f32 %v842, %v822
      %v844 = vadd.f32 %v843, %v824
      %v845 = vrot.slane %v844, 4
      %v846 = vadd.f32 %v844, %v845
      %v847 = vrot.slane %v846, 2
      %v848 = vadd.f32 %v846, %v847
      %v849 = vrot.slane %v848, 1
      %v850 = vadd.f32 %v848, %v849
      %v851 = vmul.f32 %v817, %v817
      %v852 = vmul.f32 %v818, %v818
      %v853 = vmul.f32 %v819, %v819
      %v854 = vmul.f32 %v820, %v820
      %v855 = vmul.f32 %v821, %v821
      %v856 = vmul.f32 %v822, %v822
      %v857 = vmul.f32 %v823, %v823
      %v858 = vmul.f32 %v824, %v824
      %v859 = vadd.f32 %v851, %v853
      %v860 = vadd.f32 %v859, %v855
      %v861 = vadd.f32 %v860, %v857
      %v862 = vrot.slane %v861, 4
      %v863 = vadd.f32 %v861, %v862
      %v864 = vrot.slane %v863, 2
      %v865 = vadd.f32 %v863, %v864
      %v866 = vrot.slane %v865, 1
      %v867 = vadd.f32 %v865, %v866
      %v868 = vadd.f32 %v852, %v854
      %v869 = vadd.f32 %v868, %v856
      %v870 = vadd.f32 %v869, %v858
      %v871 = vrot.slane %v870, 4
      %v872 = vadd.f32 %v870, %v871
      %v873 = vrot.slane %v872, 2
      %v874 = vadd.f32 %v872, %v873
      %v875 = vrot.slane %v874, 1
      %v876 = vadd.f32 %v874, %v875
      %vm877 = vcmask 1040384
      %v878 = vsel %vm877, %v841, %v867
      %v879 = vsel %vm877, %v850, %v876
      %v882 = vcombine.low %v878, %v879
      %v884 = vunpack.c.l.s4 1983009808
      %v885 = vunpack.c.0.s8 %v884
      %v886 = vlaneseq
      %v887 = vshrl.u32 %v886, 7
      %v888 = vsub.s32 %v885, %v887
      %v889 = vrot.slane %v882, %v888
      %891 = vst [vmem:[%s210] sm:$0xf] %v889
      %p892 = scmp.lt.s32.totalorder %s16, 1
      %s893 = scalar_select %p892, %s16, 1
      %s894 = smul.addr %s893, 8
      %s895 = smul.addr %s894, 8
      %s896 = scalar_lea.vmem %s3, %s895
      %p897 = scmp.lt.s32.totalorder %s16, 1
      %s898 = scalar_select %p897, %s16, 1
      %s899 = smul.addr %s898, 2
      %s900 = smul.addr %s899, 2
      %s901 = scalar_lea.vmem %s4, %s900
      // Predicated region
      $region33: #{upsample_layer_forward.2} parent=31 // pred_check
        %p902 = pneg %p102
      $region34: #{upsample_layer_forward.2} parent=31 // pred_check_branch
        %904 = sbr.rel (%p902) target = $region36
      $region35: #{upsample_layer_forward.2} parent=31 // pred_region
        _
      $region36: #{upsample_layer_forward.2} parent=31 // pred_fallthru
        _
      // Predicated region
      $region37: #{upsample_layer_forward.2} parent=31 // pred_check
        %p905 = pneg %p128
      $region38: #{upsample_layer_forward.2} parent=31 // pred_check_branch
        %907 = sbr.rel (%p905) target = $region40
      $region39: #{upsample_layer_forward.2} parent=31 // pred_region
        _
      $region40: #{upsample_layer_forward.2} parent=31 // pred_fallthru
        _
    $region32: #{upsample_layer_forward.2} parent=5 // pred_fallthru
      _
    %p908 = scmp.le.s32.totalorder 2, %s11
    // Predicated region
    $region41: #{upsample_layer_forward.2} parent=5 // pred_check
      %p909 = pneg %p908
    $region42: #{upsample_layer_forward.2} parent=5 // pred_check_branch
      %911 = sbr.rel (%p909) target = $region44
    $region43: #{upsample_layer_forward.2} parent=5 // pred_region
      %s912 = ssub.s32 %s11, 2
      // Predicated region
      $region45: #{upsample_layer_forward.2} parent=43 // pred_check
        %p913 = pneg %p108
      $region46: #{upsample_layer_forward.2} parent=43 // pred_check_branch
        %915 = sbr.rel (%p913) target = $region48
      $region47: #{upsample_layer_forward.2} parent=43 // pred_region
        %p916 = scmp.lt.s32.totalorder %s17, 1
        %s917 = scalar_select %p916, %s17, 1
        %s918 = smul.addr %s917, 8
        %s919 = smul.addr %s918, 8
        %s920 = scalar_lea.vmem %s3, %s919
      $region48: #{upsample_layer_forward.2} parent=43 // pred_fallthru
        _
      // Predicated region
      $region49: #{upsample_layer_forward.2} parent=43 // pred_check
        %p921 = pneg %p134
      $region50: #{upsample_layer_forward.2} parent=43 // pred_check_branch
        %923 = sbr.rel (%p921) target = $region52
      $region51: #{upsample_layer_forward.2} parent=43 // pred_region
        %p924 = scmp.lt.s32.totalorder %s17, 1
        %s925 = scalar_select %p924, %s17, 1
        %s926 = smul.addr %s925, 2
        %s927 = smul.addr %s926, 2
        %s928 = scalar_lea.vmem %s4, %s927
      $region52: #{upsample_layer_forward.2} parent=43 // pred_fallthru
        _
    $region44: #{upsample_layer_forward.2} parent=5 // pred_fallthru
      _
  $region6: #{upsample_layer_forward.2} parent=0 // loop_footer
    %s15 = sadd.s32 1, %s11
  $region7: #{upsample_layer_forward.2} parent=0 // loop_footer_branch
    %10 = sbr.rel target = $region3
  $region8: #{upsample_layer_forward.2} parent=0 // loop_exit
    _

// kernel: upsample_layer_forward.3
$region0: #{upsample_layer_forward.3}
  #allocation0 [shape = 'u32[]', space=smem, size = 0x4, offset = 0x4, fixed_abs, tag = 'smem constant byte address 0x4 - core index']
  #allocation1 [shape = 'u32[144,128]{1,0:T(1,128)}', space=vmem, size = 0x12000, scoped, tag = 'internal scratch']
  %s0 = inlined_call_operand.vmem [shape: f32[2,32,256], index: 0, kind: input, shape index: {}]
  %s1 = inlined_call_operand.vmem [shape: f32[1,256], index: 1, kind: input, shape index: {}]
  %s2 = inlined_call_operand.vmem [shape: f32[1,256], index: 2, kind: input, shape index: {}]
  %s3 = inlined_call_operand.hbm [shape: f32[2,8,32,32], index: 3, kind: output, shape index: {}]
  %s4 = sld [smem:[#allocation0]]
  $region45: #{upsample_layer_forward.3} parent=0
    _
  %s6 = ssub.s32 1, %s4
  %s7 = scalar_select 0, %s6, %s4
  $region1: #{upsample_layer_forward.3} parent=0
    #allocation2 [shape = 'u8[262144]{0}', space=vmem, size = 0x40000, scoped, tag = 'output window, operand 0']
    #allocation3 [shape = 's32[2]{0}', space=sflag, size = 0x8, scoped, tag = 'scoped memory for upsample_layer_forward.3']
    %8 = vsyncpa [#allocation3], 0
    %s9 = scalar_lea.sflag [#allocation3], 1
    %10 = vsyncpa %s9, 0
    loop: start=0, step=1, limit=4
    $region2: #{upsample_layer_forward.3} parent=1 // loop_pre_header
      _
    $region3: #{upsample_layer_forward.3} parent=1 // loop_header
      %s12 = sphi 0, %s16
      %p13 = scmp.ge.s32.totalorder %s12, 4
      %s22 = sphi 0, %s24
      %s25 = sphi 0, %s22
      %s26 = sphi 0, %s25
      %s42 = sphi 0, %s26
      %s46 = sphi 0, %s46
      %s48 = sphi 0, %s46
      %s49 = sphi 0, %s48
      %s63 = sphi 0, %s49
      %s67 = sphi 0, %s67
      %s69 = sphi 0, %s67
      %s70 = sphi 0, %s69
      %s84 = sphi 0, %s70
      %s90 = sphi 0, %s92
      %s93 = sphi 0, %s90
      %s94 = sphi 0, %s93
      %s110 = sphi 0, %s94
    $region4: #{upsample_layer_forward.3} parent=1 // loop_header_branch
      %15 = sbr.rel (%p13) target = $region8
    $region5: #{upsample_layer_forward.3} parent=1 // loop_body
      %s17 = ssub.s32 %s12, 1
      %s18 = ssub.s32 %s12, 2
      %s19 = sadd.s32 %s12, 1
      %s20 = ssub.s32 %s12, %s19
      %p21 = scmp.eq.s32.totalorder %s20, 0
      %s23 = sadd.s32 %s22, 1
      %s24 = scalar_select %p21, %s22, %s23
      %p27 = pneg %p21
      %p28 = scmp.eq.s32.totalorder %s12, 1
      %p29 = por %p27, %p28
      %p30 = scmp.ne.s32.totalorder %s22, %s25
      %p31 = scmp.eq.s32.totalorder %s12, 0
      %p32 = por %p30, %p31
      %p33 = scmp.ne.s32.totalorder %s22, %s25
      %p34 = scmp.eq.s32.totalorder %s17, 1
      %p35 = por %p33, %p34
      %p36 = scmp.ne.s32.totalorder %s25, %s26
      %p37 = scmp.eq.s32.totalorder %s17, 0
      %p38 = por %p36, %p37
      %p39 = scmp.ne.s32.totalorder %s25, %s26
      %p40 = scmp.eq.s32.totalorder %s18, 1
      %p41 = por %p39, %p40
      %p43 = scmp.ne.s32.totalorder %s26, %s42
      %p44 = scmp.eq.s32.totalorder %s18, 0
      %p45 = por %p43, %p44
      %s47 = sadd.s32 %s46, 1
      %p50 = scmp.eq.s32.totalorder %s12, 1
      %p51 = scmp.ne.s32.totalorder %s46, %s48
      %p52 = scmp.eq.s32.totalorder %s12, 0
      %p53 = por %p51, %p52
      %p54 = scmp.ne.s32.totalorder %s46, %s48
      %p55 = scmp.eq.s32.totalorder %s17, 1
      %p56 = por %p54, %p55
      %p57 = scmp.ne.s32.totalorder %s48, %s49
      %p58 = scmp.eq.s32.totalorder %s17, 0
      %p59 = por %p57, %p58
      %p60 = scmp.ne.s32.totalorder %s48, %s49
      %p61 = scmp.eq.s32.totalorder %s18, 1
      %p62 = por %p60, %p61
      %p64 = scmp.ne.s32.totalorder %s49, %s63
      %p65 = scmp.eq.s32.totalorder %s18, 0
      %p66 = por %p64, %p65
      %s68 = sadd.s32 %s67, 1
      %p71 = scmp.eq.s32.totalorder %s12, 1
      %p72 = scmp.ne.s32.totalorder %s67, %s69
      %p73 = scmp.eq.s32.totalorder %s12, 0
      %p74 = por %p72, %p73
      %p75 = scmp.ne.s32.totalorder %s67, %s69
      %p76 = scmp.eq.s32.totalorder %s17, 1
      %p77 = por %p75, %p76
      %p78 = scmp.ne.s32.totalorder %s69, %s70
      %p79 = scmp.eq.s32.totalorder %s17, 0
      %p80 = por %p78, %p79
      %p81 = scmp.ne.s32.totalorder %s69, %s70
      %p82 = scmp.eq.s32.totalorder %s18, 1
      %p83 = por %p81, %p82
      %p85 = scmp.ne.s32.totalorder %s70, %s84
      %p86 = scmp.eq.s32.totalorder %s18, 0
      %p87 = por %p85, %p86
      %s88 = ssub.s32 %s12, %s19
      %p89 = scmp.eq.s32.totalorder %s88, 0
      %s91 = sadd.s32 %s90, 1
      %s92 = scalar_select %p89, %s90, %s91
      %p95 = pneg %p89
      %p96 = scmp.eq.s32.totalorder %s12, 1
      %p97 = por %p95, %p96
      %p98 = scmp.ne.s32.totalorder %s90, %s93
      %p99 = scmp.eq.s32.totalorder %s12, 0
      %p100 = por %p98, %p99
      %p101 = scmp.ne.s32.totalorder %s90, %s93
      %p102 = scmp.eq.s32.totalorder %s17, 1
      %p103 = por %p101, %p102
      %p104 = scmp.ne.s32.totalorder %s93, %s94
      %p105 = scmp.eq.s32.totalorder %s17, 0
      %p106 = por %p104, %p105
      %p107 = scmp.ne.s32.totalorder %s93, %s94
      %p108 = scmp.eq.s32.totalorder %s18, 1
      %p109 = por %p107, %p108
      %p111 = scmp.ne.s32.totalorder %s94, %s110
      %p112 = scmp.eq.s32.totalorder %s18, 0
      %p113 = por %p111, %p112
      %p114 = scmp.le.s32.totalorder 1, %s12
      %p115 = scmp.lt.s32.totalorder %s12, 3
      %p116 = pnand %p114, %p115
      %p117 = pneg %p116
      // Predicated region
      $region9: #{upsample_layer_forward.3} parent=5 // pred_check
        _
      $region10: #{upsample_layer_forward.3} parent=5 // pred_check_branch
        %119 = sbr.rel (%p116) target = $region12
      $region11: #{upsample_layer_forward.3} parent=5 // pred_region
        %s120 = ssub.s32 %s12, 1
        // Predicated region
        $region13: #{upsample_layer_forward.3} parent=11 // pred_check
          %p121 = pneg %p59
        $region14: #{upsample_layer_forward.3} parent=11 // pred_check_branch
          %123 = sbr.rel (%p121) target = $region16
        $region15: #{upsample_layer_forward.3} parent=11 // pred_region
          _
        $region16: #{upsample_layer_forward.3} parent=11 // pred_fallthru
          _
        // Predicated region
        $region17: #{upsample_layer_forward.3} parent=11 // pred_check
          %p124 = pneg %p80
        $region18: #{upsample_layer_forward.3} parent=11 // pred_check_branch
          %126 = sbr.rel (%p124) target = $region20
        $region19: #{upsample_layer_forward.3} parent=11 // pred_region
          _
        $region20: #{upsample_layer_forward.3} parent=11 // pred_fallthru
          _
      $region12: #{upsample_layer_forward.3} parent=5 // pred_fallthru
        _
      %p127 = scmp.lt.s32.totalorder %s12, 2
      // Predicated region
      $region21: #{upsample_layer_forward.3} parent=5 // pred_check
        %p128 = pneg %p127
      $region22: #{upsample_layer_forward.3} parent=5 // pred_check_branch
        %130 = sbr.rel (%p128) target = $region24
      $region23: #{upsample_layer_forward.3} parent=5 // pred_region
        // Predicated region
        $region25: #{upsample_layer_forward.3} parent=23 // pred_check
          %p131 = pneg %p32
        $region26: #{upsample_layer_forward.3} parent=23 // pred_check_branch
          %133 = sbr.rel (%p131) target = $region28
        $region27: #{upsample_layer_forward.3} parent=23 // pred_region
          %p134 = scmp.lt.s32.totalorder %s12, 1
          %s135 = scalar_select %p134, %s12, 1
          %s136 = smul.addr %s135, 8
          %s137 = smul.addr %s136, 8
          %s138 = scalar_lea.vmem %s0, %s137
        $region28: #{upsample_layer_forward.3} parent=23 // pred_fallthru
          _
      $region24: #{upsample_layer_forward.3} parent=5 // pred_fallthru
        _
      %p139 = scmp.le.s32.totalorder 1, %s12
      %p140 = scmp.lt.s32.totalorder %s12, 3
      %p141 = pnand %p139, %p140
      %p142 = pneg %p141
      // Predicated region
      $region29: #{upsample_layer_forward.3} parent=5 // pred_check
        _
      $region30: #{upsample_layer_forward.3} parent=5 // pred_check_branch
        %144 = sbr.rel (%p141) target = $region32
      $region31: #{upsample_layer_forward.3} parent=5 // pred_region
        %s145 = ssub.s32 %s12, 1
        %p146 = scmp.lt.s32.totalorder %s17, 1
        %s147 = scalar_select %p146, %s17, 1
        %s148 = smul.addr %s147, 8
        %s149 = smul.addr %s148, 8
        %s150 = scalar_lea.vmem %s0, %s149
        %p151 = pneg %p38
        %p152 = pneg %p35
        %p153 = pneg %p59
        %p154 = pneg %p56
        %p155 = pneg %p80
        %p156 = pneg %p77
        %p157 = pneg %p106
        %p158 = pneg %p103
        %s159 = sand.u32 %s93, 1
        %s160 = scalar_lea.sflag [#allocation3], %s159
        %s161 = sand.u32 %s93, 1
        %s162 = smul.addr %s161, 256
        %s163 = scalar_lea.vmem [#allocation2], %s162
        %p164 = scmp.lt.s32.totalorder %s17, 1
        %s165 = scalar_select %p164, %s17, 1
        %s166 = smul.addr %s165, 8
        %s167 = smul.addr %s166, 8
        %s168 = scalar_lea.vmem %s0, %s167
        %v169 = vld [vmem:[%s168] sm:$0xff]
        %v170 = vld [vmem:[%s168 + $0x8] sm:$0xff]
        %v171 = vld [vmem:[%s168 + $0x10] sm:$0xff]
        %v172 = vld [vmem:[%s168 + $0x18] sm:$0xff]
        %v173 = vld [vmem:[%s168 + $0x20] sm:$0xff]
        %v174 = vld [vmem:[%s168 + $0x28] sm:$0xff]
        %v175 = vld [vmem:[%s168 + $0x30] sm:$0xff]
        %v176 = vld [vmem:[%s168 + $0x38] sm:$0xff]
        %v177 = vld [vmem:[%s1] sm:$0x3]
        %v179 = vlaneseq
        %v180 = vshrl.u32 %v179, 7
        %v181 = vsub.s32 0, %v180
        %v182 = vrot.slane %v177, %v181
        %v183 = vlaneseq
        %v184 = vshrl.u32 %v183, 7
        %v185 = vsub.s32 1, %v184
        %v186 = vrot.slane %v177, %v185
        %v189 = vmul.f32 %v169, %v182
        %v190 = vmul.f32 %v170, %v186
        %v191 = vmul.f32 %v171, %v182
        %v192 = vmul.f32 %v172, %v186
        %v193 = vmul.f32 %v173, %v182
        %v194 = vmul.f32 %v174, %v186
        %v195 = vmul.f32 %v175, %v182
        %v196 = vmul.f32 %v176, %v186
        %v197 = vld [vmem:[%s2] sm:$0x3]
        %v199 = vlaneseq
        %v200 = vshrl.u32 %v199, 7
        %v201 = vsub.s32 0, %v200
        %v202 = vrot.slane %v197, %v201
        %v203 = vlaneseq
        %v204 = vshrl.u32 %v203, 7
        %v205 = vsub.s32 1, %v204
        %v206 = vrot.slane %v197, %v205
        %v209 = vadd.f32 %v189, %v202
        %v210 = vadd.f32 %v190, %v206
        %v211 = vadd.f32 %v191, %v202
        %v212 = vadd.f32 %v192, %v206
        %v213 = vadd.f32 %v193, %v202
        %v214 = vadd.f32 %v194, %v206
        %v215 = vadd.f32 %v195, %v202
        %v216 = vadd.f32 %v196, %v206
        %v217 = vmax.f32 %v209, 0.0
        %v218 = vmax.f32 %v210, 0.0
        %v219 = vmax.f32 %v211, 0.0
        %v220 = vmax.f32 %v212, 0.0
        %v221 = vmax.f32 %v213, 0.0
        %v222 = vmax.f32 %v214, 0.0
        %v223 = vmax.f32 %v215, 0.0
        %v224 = vmax.f32 %v216, 0.0
        %vm225 = vcmask 261120
        %226 = vst.msk [vmem:[%s163] sm:$0xff] %vm225, %v217
        %227 = vst.msk [vmem:[%s163 + $0x8] sm:$0xff] %vm225, %v219
        %228 = vst.msk [vmem:[%s163 + $0x10] sm:$0xff] %vm225, %v221
        %229 = vst.msk [vmem:[%s163 + $0x18] sm:$0xff] %vm225, %v223
        %234 = vrot.lane.b32.xlu0 %v217, 96
        %v235 = vpop.permute.xlu0 %234
        %236 = vrot.lane.b32.xlu0 %v219, 96
        %v237 = vpop.permute.xlu0 %236
        %238 = vrot.lane.b32.xlu0 %v221, 96
        %v239 = vpop.permute.xlu0 %238
        %240 = vrot.lane.b32.xlu0 %v223, 96
        %v241 = vpop.permute.xlu0 %240
        %s246 = scalar_lea.vmem %s163, 32 [#allocation2]
        %247 = vst.msk [vmem:[%s246] sm:$0xff] %vm225, %v235
        %248 = vst.msk [vmem:[%s246 + $0x8] sm:$0xff] %vm225, %v237
        %249 = vst.msk [vmem:[%s246 + $0x10] sm:$0xff] %vm225, %v239
        %250 = vst.msk [vmem:[%s246 + $0x18] sm:$0xff] %vm225, %v241
        %251 = vrot.lane.b32.xlu0 %v217, 64
        %v252 = vpop.permute.xlu0 %251
        %253 = vrot.lane.b32.xlu0 %v219, 64
        %v254 = vpop.permute.xlu0 %253
        %255 = vrot.lane.b32.xlu0 %v221, 64
        %v256 = vpop.permute.xlu0 %255
        %257 = vrot.lane.b32.xlu0 %v223, 64
        %v258 = vpop.permute.xlu0 %257
        %s263 = scalar_lea.vmem %s163, 64 [#allocation2]
        %264 = vst.msk [vmem:[%s263] sm:$0xff] %vm225, %v252
        %265 = vst.msk [vmem:[%s263 + $0x8] sm:$0xff] %vm225, %v254
        %266 = vst.msk [vmem:[%s263 + $0x10] sm:$0xff] %vm225, %v256
        %267 = vst.msk [vmem:[%s263 + $0x18] sm:$0xff] %vm225, %v258
        %268 = vrot.lane.b32.xlu0 %v217, 32
        %v269 = vpop.permute.xlu0 %268
        %270 = vrot.lane.b32.xlu0 %v219, 32
        %v271 = vpop.permute.xlu0 %270
        %272 = vrot.lane.b32.xlu0 %v221, 32
        %v273 = vpop.permute.xlu0 %272
        %274 = vrot.lane.b32.xlu0 %v223, 32
        %v275 = vpop.permute.xlu0 %274
        %s280 = scalar_lea.vmem %s163, 96 [#allocation2]
        %281 = vst.msk [vmem:[%s280] sm:$0xff] %vm225, %v269
        %282 = vst.msk [vmem:[%s280 + $0x8] sm:$0xff] %vm225, %v271
        %283 = vst.msk [vmem:[%s280 + $0x10] sm:$0xff] %vm225, %v273
        %284 = vst.msk [vmem:[%s280 + $0x18] sm:$0xff] %vm225, %v275
        %s285 = scalar_lea.vmem %s163, 128 [#allocation2]
        %286 = vst.msk [vmem:[%s285] sm:$0xff] %vm225, %v218
        %287 = vst.msk [vmem:[%s285 + $0x8] sm:$0xff] %vm225, %v220
        %288 = vst.msk [vmem:[%s285 + $0x10] sm:$0xff] %vm225, %v222
        %289 = vst.msk [vmem:[%s285 + $0x18] sm:$0xff] %vm225, %v224
        %294 = vrot.lane.b32.xlu0 %v218, 96
        %v295 = vpop.permute.xlu0 %294
        %296 = vrot.lane.b32.xlu0 %v220, 96
        %v297 = vpop.permute.xlu0 %296
        %298 = vrot.lane.b32.xlu0 %v222, 96
        %v299 = vpop.permute.xlu0 %298
        %300 = vrot.lane.b32.xlu0 %v224, 96
        %v301 = vpop.permute.xlu0 %300
        %s306 = scalar_lea.vmem %s163, 160 [#allocation2]
        %307 = vst.msk [vmem:[%s306] sm:$0xff] %vm225, %v295
        %308 = vst.msk [vmem:[%s306 + $0x8] sm:$0xff] %vm225, %v297
        %309 = vst.msk [vmem:[%s306 + $0x10] sm:$0xff] %vm225, %v299
        %310 = vst.msk [vmem:[%s306 + $0x18] sm:$0xff] %vm225, %v301
        %311 = vrot.lane.b32.xlu0 %v218, 64
        %v312 = vpop.permute.xlu0 %311
        %313 = vrot.lane.b32.xlu0 %v220, 64
        %v314 = vpop.permute.xlu0 %313
        %315 = vrot.lane.b32.xlu0 %v222, 64
        %v316 = vpop.permute.xlu0 %315
        %317 = vrot.lane.b32.xlu0 %v224, 64
        %v318 = vpop.permute.xlu0 %317
        %s323 = scalar_lea.vmem %s163, 192 [#allocation2]
        %324 = vst.msk [vmem:[%s323] sm:$0xff] %vm225, %v312
        %325 = vst.msk [vmem:[%s323 + $0x8] sm:$0xff] %vm225, %v314
        %326 = vst.msk [vmem:[%s323 + $0x10] sm:$0xff] %vm225, %v316
        %327 = vst.msk [vmem:[%s323 + $0x18] sm:$0xff] %vm225, %v318
        %328 = vrot.lane.b32.xlu0 %v218, 32
        %v329 = vpop.permute.xlu0 %328
        %330 = vrot.lane.b32.xlu0 %v220, 32
        %v331 = vpop.permute.xlu0 %330
        %332 = vrot.lane.b32.xlu0 %v222, 32
        %v333 = vpop.permute.xlu0 %332
        %334 = vrot.lane.b32.xlu0 %v224, 32
        %v335 = vpop.permute.xlu0 %334
        %s340 = scalar_lea.vmem %s163, 224 [#allocation2]
        %341 = vst.msk [vmem:[%s340] sm:$0xff] %vm225, %v329
        %342 = vst.msk [vmem:[%s340 + $0x8] sm:$0xff] %vm225, %v331
        %343 = vst.msk [vmem:[%s340 + $0x10] sm:$0xff] %vm225, %v333
        %344 = vst.msk [vmem:[%s340 + $0x18] sm:$0xff] %vm225, %v335
        %s345 = sand.u32 %s93, 1
        %s346 = scalar_lea.sflag [#allocation3], %s345
        %s347 = sand.u32 %s93, 1
        %s348 = smul.addr %s347, 256
        %s349 = scalar_lea.vmem [#allocation2], %s348
        // Predicated region
        $region33: #{upsample_layer_forward.3} parent=31 // pred_check
          %p350 = pneg %p103
        $region34: #{upsample_layer_forward.3} parent=31 // pred_check_branch
          %352 = sbr.rel (%p350) target = $region36
        $region35: #{upsample_layer_forward.3} parent=31 // pred_region
          %s354 = ssub.s32 4096, 4096
          %355 = vsyncadd %s346, %s354
          %s356 = smul.addr %s17, 32
          %s357 = smul.addr %s356, 128
          %s358 = scalar_lea.hbm %s3, %s357
          %s359 = sshll.u32 %s349, 4
          %s360 = int_to_ptr.vmem [resolvable:$true] %s359
          %365 = dma.vmem_to_hbm [thread:$0]  %s360, 4096, %s358, %s346, 128, 128, 8
        $region36: #{upsample_layer_forward.3} parent=31 // pred_fallthru
          _
      $region32: #{upsample_layer_forward.3} parent=5 // pred_fallthru
        _
      %p366 = scmp.le.s32.totalorder 2, %s12
      // Predicated region
      $region37: #{upsample_layer_forward.3} parent=5 // pred_check
        %p367 = pneg %p366
      $region38: #{upsample_layer_forward.3} parent=5 // pred_check_branch
        %369 = sbr.rel (%p367) target = $region40
      $region39: #{upsample_layer_forward.3} parent=5 // pred_region
        %s370 = ssub.s32 %s12, 2
        // Predicated region
        $region41: #{upsample_layer_forward.3} parent=39 // pred_check
          %p371 = pneg %p109
        $region42: #{upsample_layer_forward.3} parent=39 // pred_check_branch
          %373 = sbr.rel (%p371) target = $region44
        $region43: #{upsample_layer_forward.3} parent=39 // pred_region
          %s374 = sand.u32 %s94, 1
          %s375 = scalar_lea.sflag [#allocation3], %s374
          %s376 = sand.u32 %s94, 1
          %s377 = smul.addr %s376, 256
          %s378 = scalar_lea.vmem [#allocation2], %s377
          %379 = dma.done %s375, 4096
        $region44: #{upsample_layer_forward.3} parent=39 // pred_fallthru
          _
      $region40: #{upsample_layer_forward.3} parent=5 // pred_fallthru
        _
    $region6: #{upsample_layer_forward.3} parent=1 // loop_footer
      %s16 = sadd.s32 1, %s12
    $region7: #{upsample_layer_forward.3} parent=1 // loop_footer_branch
      %11 = sbr.rel target = $region3
    $region8: #{upsample_layer_forward.3} parent=1 // loop_exit
      _
    %380 = vsyncpa [#allocation3], 1
    %s381 = scalar_lea.sflag [#allocation3], 1
    %382 = vsyncpa %s381, 1

</llo_original>
